<compile_context>
chip_gen: v6e
topology: v6e:2x2x1
jax: 0.10.0
libtpu: 0.0.40
codegen_flags: <defaults>
</compile_context>

<pallas_src>
import jax
import jax.numpy as jnp
from jax.experimental import pallas as pl
from jax.experimental.pallas import tpu as pltpu

_LANES = 128


def _round_up(a, b):
    return (a + b - 1) // b * b


def _pick_tb(n):
    # Largest batch tile in {8,4,2} dividing N while keeping >= 2 steps on the
    # "parallel" axis (so megacore still has something to shard).
    for cand in (8, 4, 2):
        if n % cand == 0 and n // cand >= 2:
            return cand
    return 1


def _make_kernel(TB, C, THW, HW):
    need_mask = (HW % THW) != 0          # only the last spatial tile is ragged
    inv_hw = 1.0 / float(HW)

    def kernel(x_ref, w1t_ref, w2t_ref, o_ref, sum_acc, max_acc):
        k = pl.program_id(1)

        @pl.when(k == 0)
        def _init():
            sum_acc[...] = jnp.zeros_like(sum_acc)
            max_acc[...] = jnp.full_like(max_acc, -jnp.inf)

        x = x_ref[...].astype(jnp.float32)                 # (TB, C, THW)
        if need_mask:
            # Lanes past HW in the last tile hold unspecified data (partial
            # block): neutralize them for both reductions.
            lane = jax.lax.broadcasted_iota(jnp.int32, (TB, C, THW), 2)
            valid = (k * THW + lane) < HW
            x_sum = jnp.where(valid, x, 0.0)
            x_max = jnp.where(valid, x, -jnp.inf)
        else:
            x_sum = x
            x_max = x
        sum_acc[...] = sum_acc[...] + jnp.sum(x_sum, axis=2)          # (TB, C)
        max_acc[...] = jnp.maximum(max_acc[...], jnp.max(x_max, axis=2))

        @pl.when(k == pl.num_programs(1) - 1)
        def _finalize():
            avg = sum_acc[...] * inv_hw                                # (TB, C)
            mx = max_acc[...]                                          # (TB, C)

            def fc(v):
                h = jnp.dot(v, w1t_ref[...],
                            preferred_element_type=jnp.float32)       # (TB, Cr)
                h = jnp.maximum(h, 0.0)
                return jnp.dot(h, w2t_ref[...],
                               preferred_element_type=jnp.float32)    # (TB, C)

            gate = jax.nn.sigmoid(fc(avg) + fc(mx))
            o_ref[:, 0, :] = gate.astype(o_ref.dtype)

    return kernel


def channel_attention(x, w1, w2, *, tile_bytes=4 * 1024 * 1024):
    """x: (N, C, H, W); w1: (Cr, C); w2: (C, Cr). Returns sigmoid gate (N, C, 1, 1)."""
    N, C, H, W = x.shape
    Cr = w1.shape[0]
    HW = H * W

    TB = _pick_tb(N)

    # Spatial tile: multiple of 128 lanes, capped so one x buffer stays under
    # `tile_bytes` (default 4 MiB -> ~8 MiB double-buffered: comfortably inside
    # the scoped-VMEM budget on v5e/v6e/v7x while already past the ~85%
    # HBM-roofline tile size).
    max_thw = max(_LANES, (tile_bytes // (TB * C * 4)) // _LANES * _LANES)
    THW = min(_round_up(HW, _LANES), max_thw)

    x_flat = x.reshape(N, C, HW)         # contiguous reshape: no HBM copy
    w1t = w1.T                           # (C, Cr)  -- VMEM-resident (constant index_map)
    w2t = w2.T                           # (Cr, C)

    kernel = _make_kernel(TB, C, THW, HW)

    out = pl.pallas_call(
        kernel,
        out_shape=jax.ShapeDtypeStruct((N, 1, C), jnp.float32),
        grid_spec=pltpu.PrefetchScalarGridSpec(
            num_scalar_prefetch=0,
            grid=(N // TB, pl.cdiv(HW, THW)),
            in_specs=[
                pl.BlockSpec((TB, C, THW), lambda b, k: (b, 0, k)),
                pl.BlockSpec((C, Cr), lambda b, k: (0, 0)),
                pl.BlockSpec((Cr, C), lambda b, k: (0, 0)),
            ],
            out_specs=pl.BlockSpec((TB, 1, C), lambda b, k: (b, 0, 0)),
            scratch_shapes=[
                pltpu.VMEM((TB, C), jnp.float32),   # running sum
                pltpu.VMEM((TB, C), jnp.float32),   # running max
            ],
        ),
        compiler_params=pltpu.CompilerParams(
            dimension_semantics=("parallel", "arbitrary"),
            vmem_limit_bytes=32 * 1024 * 1024,
        ),
    )(x_flat, w1t, w2t)

    return out.reshape(N, C, 1, 1)


def channel_attention_ref(x, w1, w2):
    """Plain-JAX reference mirroring the PyTorch module."""
    avg = jnp.mean(x, axis=(2, 3))
    mx = jnp.max(x, axis=(2, 3))

    def fc(v):
        return jnp.maximum(v @ w1.T, 0.0) @ w2.T

    return jax.nn.sigmoid(fc(avg) + fc(mx))[:, :, None, None]


def _run_case(key, N, C, H, W, ratio, **kw):
    Cr = max(C // ratio, 1)
    kx, k1, k2 = jax.random.split(key, 3)
    x = jax.random.normal(kx, (N, C, H, W), dtype=jnp.float32)
    w1 = jax.random.normal(k1, (Cr, C), dtype=jnp.float32) * (1.0 / jnp.sqrt(C))
    w2 = jax.random.normal(k2, (C, Cr), dtype=jnp.float32) * (1.0 / jnp.sqrt(Cr))
    out = jax.block_until_ready(channel_attention(x, w1, w2, **kw))
    ref = channel_attention_ref(x, w1, w2)
    assert out.shape == (N, C, 1, 1)
    assert jnp.allclose(out, ref, atol=1e-4, rtol=1e-4), f"mismatch at {(N, C, H, W)}"


if __name__ == "__main__":
    key = jax.random.PRNGKey(0)
    k1, k2, k3 = jax.random.split(key, 3)
    # Default config (in_planes=64, ratio=16 -> hidden 4), single spatial tile.
    _run_case(k1, N=2, C=64, H=16, W=16, ratio=16)
    # Non-128-multiple spatial size + tiny tile budget: exercises the
    # multi-tile reduction axis plus the ragged-last-tile mask path.
    _run_case(k2, N=2, C=64, H=24, W=24, ratio=16, tile_bytes=64 * 1024)
    # Batched path: TB=4 images per grid step.
    _run_case(k3, N=8, C=32, H=16, W=16, ratio=8)
    print("KERNEL_OK")
</pallas_src>

<mosaic_0001>
module attributes {stable_mosaic.version = 11 : i64} {
  func.func @kernel(%arg0: i32, %arg1: i32, %arg2: memref<1x64x256xf32, #tpu.memory_space<vmem>>, %arg3: memref<64x4xf32, #tpu.memory_space<vmem>>, %arg4: memref<4x64xf32, #tpu.memory_space<vmem>>, %arg5: memref<1x1x64xf32, #tpu.memory_space<vmem>>, %arg6: memref<1x64xf32, #tpu.memory_space<vmem>>, %arg7: memref<1x64xf32, #tpu.memory_space<vmem>>) attributes {dimension_semantics = [#tpu.dimension_semantics<parallel>, #tpu.dimension_semantics<arbitrary>], iteration_bounds = array<i64: 2, 1>, scalar_prefetch = 0 : i64, scratch_operands = 2 : i64, tpu.core_type = #tpu.core_type<tc>, window_params = [{transform_indices = @transform_0, window_bounds = array<i64: 1, 64, 256>}, {pipeline_mode = #tpu.pipeline_mode<synchronous>, transform_indices = @transform_1, window_bounds = array<i64: 64, 4>}, {pipeline_mode = #tpu.pipeline_mode<synchronous>, transform_indices = @transform_2, window_bounds = array<i64: 4, 64>}, {transform_indices = @transform_3, window_bounds = array<i64: 1, 1, 64>}]} {
    %c0_i32 = arith.constant 0 : i32
    %0 = arith.cmpi eq, %arg1, %c0_i32 : i32
    %1 = arith.extui %0 : i1 to i32
    %c0_i32_0 = arith.constant 0 : i32
    %2 = arith.cmpi ne, %1, %c0_i32_0 : i32
    scf.if %2 {
      %cst_14 = arith.constant 0.000000e+00 : f32
      %15 = vector.broadcast %cst_14 : f32 to vector<1x64xf32>
      %c0_15 = arith.constant 0 : index
      %c0_16 = arith.constant 0 : index
      %16 = vector.load %arg6[%c0_15, %c0_16] : memref<1x64xf32, #tpu.memory_space<vmem>>, vector<1x64xf32>
      tpu.vector_store %arg6[%c0_15, %c0_16], %15 {strides = array<i32>} : memref<1x64xf32, #tpu.memory_space<vmem>>, vector<1x64xf32>,
      %cst_17 = arith.constant 0xFF800000 : f32
      %17 = vector.broadcast %cst_17 : f32 to vector<1x64xf32>
      %c0_18 = arith.constant 0 : index
      %c0_19 = arith.constant 0 : index
      %18 = vector.load %arg7[%c0_18, %c0_19] : memref<1x64xf32, #tpu.memory_space<vmem>>, vector<1x64xf32>
      tpu.vector_store %arg7[%c0_18, %c0_19], %17 {strides = array<i32>} : memref<1x64xf32, #tpu.memory_space<vmem>>, vector<1x64xf32>,
    } else {
    }
    %c0 = arith.constant 0 : index
    %c0_1 = arith.constant 0 : index
    %c0_2 = arith.constant 0 : index
    %3 = vector.load %arg2[%c0, %c0_1, %c0_2] : memref<1x64x256xf32, #tpu.memory_space<vmem>>, vector<1x64x256xf32>
    %c0_3 = arith.constant 0 : index
    %c0_4 = arith.constant 0 : index
    %4 = vector.load %arg6[%c0_3, %c0_4] : memref<1x64xf32, #tpu.memory_space<vmem>>, vector<1x64xf32>
    %cst = arith.constant dense<0.000000e+00> : vector<1x64xf32>
    %5 = vector.multi_reduction <add>, %3, %cst [2] : vector<1x64x256xf32> to vector<1x64xf32>
    %6 = arith.addf %4, %5 : vector<1x64xf32>
    %c0_5 = arith.constant 0 : index
    %c0_6 = arith.constant 0 : index
    %7 = vector.load %arg6[%c0_5, %c0_6] : memref<1x64xf32, #tpu.memory_space<vmem>>, vector<1x64xf32>
    tpu.vector_store %arg6[%c0_5, %c0_6], %6 {strides = array<i32>} : memref<1x64xf32, #tpu.memory_space<vmem>>, vector<1x64xf32>,
    %c0_7 = arith.constant 0 : index
    %c0_8 = arith.constant 0 : index
    %8 = vector.load %arg7[%c0_7, %c0_8] : memref<1x64xf32, #tpu.memory_space<vmem>>, vector<1x64xf32>
    %cst_9 = arith.constant dense<0xFF800000> : vector<1x64xf32>
    %9 = vector.multi_reduction <maximumf>, %3, %cst_9 [2] : vector<1x64x256xf32> to vector<1x64xf32>
    %10 = arith.maximumf %8, %9 : vector<1x64xf32>
    %c0_10 = arith.constant 0 : index
    %c0_11 = arith.constant 0 : index
    %11 = vector.load %arg7[%c0_10, %c0_11] : memref<1x64xf32, #tpu.memory_space<vmem>>, vector<1x64xf32>
    tpu.vector_store %arg7[%c0_10, %c0_11], %10 {strides = array<i32>} : memref<1x64xf32, #tpu.memory_space<vmem>>, vector<1x64xf32>,
    %c0_i32_12 = arith.constant 0 : i32
    %12 = arith.cmpi eq, %arg1, %c0_i32_12 : i32
    %13 = arith.extui %12 : i1 to i32
    %c0_i32_13 = arith.constant 0 : i32
    %14 = arith.cmpi ne, %13, %c0_i32_13 : i32
    scf.if %14 {
      %c0_14 = arith.constant 0 : index
      %c0_15 = arith.constant 0 : index
      %15 = vector.load %arg6[%c0_14, %c0_15] : memref<1x64xf32, #tpu.memory_space<vmem>>, vector<1x64xf32>
      %cst_16 = arith.constant 3.906250e-03 : f32
      %16 = vector.broadcast %cst_16 : f32 to vector<1x64xf32>
      %17 = arith.mulf %15, %16 : vector<1x64xf32>
      %c0_17 = arith.constant 0 : index
      %c0_18 = arith.constant 0 : index
      %18 = vector.load %arg7[%c0_17, %c0_18] : memref<1x64xf32, #tpu.memory_space<vmem>>, vector<1x64xf32>
      %c0_19 = arith.constant 0 : index
      %c0_20 = arith.constant 0 : index
      %19 = vector.load %arg3[%c0_19, %c0_20] : memref<64x4xf32, #tpu.memory_space<vmem>>, vector<64x4xf32>
      %cst_21 = arith.constant dense<0.000000e+00> : vector<1x4xf32>
      %20 = tpu.matmul %17, %19, %cst_21 {dimension_numbers = #tpu.dot_dimension_numbers<[1], [0], [0], [1], [0, 0, 1, 1], [], []>} : vector<1x64xf32>, vector<64x4xf32>, vector<1x4xf32> -> vector<1x4xf32>
      %cst_22 = arith.constant 0.000000e+00 : f32
      %21 = vector.broadcast %cst_22 : f32 to vector<1x4xf32>
      %22 = arith.maximumf %20, %21 : vector<1x4xf32>
      %c0_23 = arith.constant 0 : index
      %c0_24 = arith.constant 0 : index
      %23 = vector.load %arg4[%c0_23, %c0_24] : memref<4x64xf32, #tpu.memory_space<vmem>>, vector<4x64xf32>
      %cst_25 = arith.constant dense<0.000000e+00> : vector<1x64xf32>
      %24 = tpu.matmul %22, %23, %cst_25 {dimension_numbers = #tpu.dot_dimension_numbers<[1], [0], [0], [1], [0, 0, 1, 1], [], []>} : vector<1x4xf32>, vector<4x64xf32>, vector<1x64xf32> -> vector<1x64xf32>
      %c0_26 = arith.constant 0 : index
      %c0_27 = arith.constant 0 : index
      %25 = vector.load %arg3[%c0_26, %c0_27] : memref<64x4xf32, #tpu.memory_space<vmem>>, vector<64x4xf32>
      %cst_28 = arith.constant dense<0.000000e+00> : vector<1x4xf32>
      %26 = tpu.matmul %18, %25, %cst_28 {dimension_numbers = #tpu.dot_dimension_numbers<[1], [0], [0], [1], [0, 0, 1, 1], [], []>} : vector<1x64xf32>, vector<64x4xf32>, vector<1x4xf32> -> vector<1x4xf32>
      %cst_29 = arith.constant 0.000000e+00 : f32
      %27 = vector.broadcast %cst_29 : f32 to vector<1x4xf32>
      %28 = arith.maximumf %26, %27 : vector<1x4xf32>
      %c0_30 = arith.constant 0 : index
      %c0_31 = arith.constant 0 : index
      %29 = vector.load %arg4[%c0_30, %c0_31] : memref<4x64xf32, #tpu.memory_space<vmem>>, vector<4x64xf32>
      %cst_32 = arith.constant dense<0.000000e+00> : vector<1x64xf32>
      %30 = tpu.matmul %28, %29, %cst_32 {dimension_numbers = #tpu.dot_dimension_numbers<[1], [0], [0], [1], [0, 0, 1, 1], [], []>} : vector<1x4xf32>, vector<4x64xf32>, vector<1x64xf32> -> vector<1x64xf32>
      %31 = arith.addf %24, %30 : vector<1x64xf32>
      %32 = arith.negf %31 : vector<1x64xf32>
      %33 = math.exp %32 : vector<1x64xf32>
      %cst_33 = arith.constant 1.000000e+00 : f32
      %34 = vector.broadcast %cst_33 : f32 to vector<1x64xf32>
      %35 = arith.addf %34, %33 : vector<1x64xf32>
      %36 = arith.divf %34, %35 : vector<1x64xf32>
      %c0_34 = arith.constant 0 : index
      %c0_35 = arith.constant 0 : index
      %c0_36 = arith.constant 0 : index
      %37 = vector.load %arg5[%c0_34, %c0_35, %c0_36] : memref<1x1x64xf32, #tpu.memory_space<vmem>>, vector<1x1x64xf32>
      %38 = vector.shape_cast %37 : vector<1x1x64xf32> to vector<1x64xf32>
      %39 = vector.shape_cast %36 : vector<1x64xf32> to vector<1x1x64xf32>
      tpu.vector_store %arg5[%c0_34, %c0_35, %c0_36], %39 {strides = array<i32>} : memref<1x1x64xf32, #tpu.memory_space<vmem>>, vector<1x1x64xf32>,
    } else {
    }
    return
  }
  func.func @transform_0(%arg0: i32, %arg1: i32) -> (i32, i32, i32) {
    %c0_i32 = arith.constant 0 : i32
    %c0_i32_0 = arith.constant 0 : i32
    return %arg0, %c0_i32, %arg1 : i32, i32, i32
  }
  func.func @transform_1(%arg0: i32, %arg1: i32) -> (i32, i32) {
    %c0_i32 = arith.constant 0 : i32
    %c0_i32_0 = arith.constant 0 : i32
    %c0_i32_1 = arith.constant 0 : i32
    return %c0_i32, %c0_i32_0 : i32, i32
  }
  func.func @transform_2(%arg0: i32, %arg1: i32) -> (i32, i32) {
    %c0_i32 = arith.constant 0 : i32
    %c0_i32_0 = arith.constant 0 : i32
    %c0_i32_1 = arith.constant 0 : i32
    return %c0_i32, %c0_i32_0 : i32, i32
  }
  func.func @transform_3(%arg0: i32, %arg1: i32) -> (i32, i32, i32) {
    %c0_i32 = arith.constant 0 : i32
    %c0_i32_0 = arith.constant 0 : i32
    %c0_i32_1 = arith.constant 0 : i32
    return %arg0, %c0_i32, %c0_i32_0 : i32, i32, i32
  }
}

</mosaic_0001>

<llo_original>
// kernel: tpu_custom_call.1
$region0: #{tpu_custom_call.1}
  #allocation0 [shape = 'u32[]', space=smem, size = 0x4, offset = 0x4, fixed_abs, tag = 'smem constant byte address 0x4 - core index']
  #allocation1 [shape = 'u32[144,128]{1,0:T(1,128)}', space=vmem, size = 0x12000, scoped, tag = 'internal scratch']
  #allocation2 [shape = 'f32[1,64]{1,0:T(1,128)}', space=vmem, size = 0x200, scoped, tag = 'scratch operand']
  #allocation3 [shape = 'f32[1,64]{1,0:T(1,128)}', space=vmem, size = 0x200, scoped, tag = 'scratch operand']
  %s0 = inlined_call_operand.hbm [shape: f32[2,64,256], index: 0, kind: input, shape index: {}]
  %s1 = inlined_call_operand.vmem [shape: f32[64,4], index: 1, kind: input, shape index: {}]
  %s2 = inlined_call_operand.vmem [shape: f32[4,64], index: 2, kind: input, shape index: {}]
  %s3 = inlined_call_operand.hbm [shape: f32[2,1,64], index: 3, kind: output, shape index: {}]
  %s4 = sld [smem:[#allocation0]]
  $region57: #{tpu_custom_call.1} parent=0
    _
  %s6 = ssub.s32 1, %s4
  %s7 = scalar_select 0, %s6, %s4
  $region1: #{tpu_custom_call.1} parent=0
    #allocation4 [shape = 'u8[131072]{0}', space=vmem, size = 0x20000, scoped, tag = 'input window, operand 0']
    #allocation5 [shape = 's32[2]{0}', space=sflag, size = 0x8, scoped, tag = 'scoped memory for tpu_custom_call.1']
    #allocation6 [shape = 's32[2]{0}', space=sflag, size = 0x8, scoped, tag = 'scoped memory for tpu_custom_call.1']
    #allocation7 [shape = 'u8[1024]{0}', space=vmem, size = 0x400, scoped, tag = 'output window, operand 0']
    %8 = vsyncpa [#allocation5], 0
    %s9 = scalar_lea.sflag [#allocation5], 1
    %10 = vsyncpa %s9, 0
    %11 = vsyncpa [#allocation6], 0
    %s12 = scalar_lea.sflag [#allocation6], 1
    %13 = vsyncpa %s12, 0
    loop: start=0, step=1, limit=4
    $region2: #{tpu_custom_call.1} parent=1 // loop_pre_header
      _
    $region3: #{tpu_custom_call.1} parent=1 // loop_header
      %s15 = sphi 0, %s19
      %p16 = scmp.ge.s32.totalorder %s15, 4
      %s22 = sphi 0, %s34
      %s23 = sphi 0, %s30
      %s24 = sphi 0, %s22
      %s25 = sphi 0, %s23
      %s26 = sphi 0, %s24
      %s27 = sphi 0, %s25
      %s39 = sphi 0, %s41
      %s42 = sphi 0, %s39
      %s43 = sphi 0, %s42
      %s59 = sphi 0, %s43
      %s63 = sphi 0, %s63
      %s65 = sphi 0, %s63
      %s66 = sphi 0, %s65
      %s80 = sphi 0, %s66
      %s84 = sphi 0, %s84
      %s86 = sphi 0, %s84
      %s87 = sphi 0, %s86
      %s101 = sphi 0, %s87
      %s107 = sphi 0, %s109
      %s110 = sphi 0, %s107
      %s111 = sphi 0, %s110
      %s127 = sphi 0, %s111
    $region4: #{tpu_custom_call.1} parent=1 // loop_header_branch
      %18 = sbr.rel (%p16) target = $region8
    $region5: #{tpu_custom_call.1} parent=1 // loop_body
      %s20 = ssub.s32 %s15, 1
      %s21 = ssub.s32 %s15, 2
      %s28 = sadd.s32 1, %s23
      %p29 = scmp.ge.s32.totalorder %s28, 1
      %s30 = scalar_select %p29, 0, %s28
      %s31 = sadd.s32 1, %s22
      %s32 = scalar_select %p29, %s31, %s22
      %p33 = scmp.ge.s32.totalorder %s32, 2
      %s34 = scalar_select %p33, 0, %s32
      %s35 = ssub.s32 %s22, %s34
      %s36 = ssub.s32 %s23, %s30
      %s37 = sor.u32 %s35, %s36
      %p38 = scmp.eq.s32.totalorder %s37, 0
      %s40 = sadd.s32 %s39, 1
      %s41 = scalar_select %p38, %s39, %s40
      %p44 = pneg %p38
      %p45 = scmp.eq.s32.totalorder %s15, 1
      %p46 = por %p44, %p45
      %p47 = scmp.ne.s32.totalorder %s39, %s42
      %p48 = scmp.eq.s32.totalorder %s15, 0
      %p49 = por %p47, %p48
      %p50 = scmp.ne.s32.totalorder %s39, %s42
      %p51 = scmp.eq.s32.totalorder %s20, 1
      %p52 = por %p50, %p51
      %p53 = scmp.ne.s32.totalorder %s42, %s43
      %p54 = scmp.eq.s32.totalorder %s20, 0
      %p55 = por %p53, %p54
      %p56 = scmp.ne.s32.totalorder %s42, %s43
      %p57 = scmp.eq.s32.totalorder %s21, 1
      %p58 = por %p56, %p57
      %p60 = scmp.ne.s32.totalorder %s43, %s59
      %p61 = scmp.eq.s32.totalorder %s21, 0
      %p62 = por %p60, %p61
      %s64 = sadd.s32 %s63, 1
      %p67 = scmp.eq.s32.totalorder %s15, 1
      %p68 = scmp.ne.s32.totalorder %s63, %s65
      %p69 = scmp.eq.s32.totalorder %s15, 0
      %p70 = por %p68, %p69
      %p71 = scmp.ne.s32.totalorder %s63, %s65
      %p72 = scmp.eq.s32.totalorder %s20, 1
      %p73 = por %p71, %p72
      %p74 = scmp.ne.s32.totalorder %s65, %s66
      %p75 = scmp.eq.s32.totalorder %s20, 0
      %p76 = por %p74, %p75
      %p77 = scmp.ne.s32.totalorder %s65, %s66
      %p78 = scmp.eq.s32.totalorder %s21, 1
      %p79 = por %p77, %p78
      %p81 = scmp.ne.s32.totalorder %s66, %s80
      %p82 = scmp.eq.s32.totalorder %s21, 0
      %p83 = por %p81, %p82
      %s85 = sadd.s32 %s84, 1
      %p88 = scmp.eq.s32.totalorder %s15, 1
      %p89 = scmp.ne.s32.totalorder %s84, %s86
      %p90 = scmp.eq.s32.totalorder %s15, 0
      %p91 = por %p89, %p90
      %p92 = scmp.ne.s32.totalorder %s84, %s86
      %p93 = scmp.eq.s32.totalorder %s20, 1
      %p94 = por %p92, %p93
      %p95 = scmp.ne.s32.totalorder %s86, %s87
      %p96 = scmp.eq.s32.totalorder %s20, 0
      %p97 = por %p95, %p96
      %p98 = scmp.ne.s32.totalorder %s86, %s87
      %p99 = scmp.eq.s32.totalorder %s21, 1
      %p100 = por %p98, %p99
      %p102 = scmp.ne.s32.totalorder %s87, %s101
      %p103 = scmp.eq.s32.totalorder %s21, 0
      %p104 = por %p102, %p103
      %s105 = ssub.s32 %s22, %s34
      %p106 = scmp.eq.s32.totalorder %s105, 0
      %s108 = sadd.s32 %s107, 1
      %s109 = scalar_select %p106, %s107, %s108
      %p112 = pneg %p106
      %p113 = scmp.eq.s32.totalorder %s15, 1
      %p114 = por %p112, %p113
      %p115 = scmp.ne.s32.totalorder %s107, %s110
      %p116 = scmp.eq.s32.totalorder %s15, 0
      %p117 = por %p115, %p116
      %p118 = scmp.ne.s32.totalorder %s107, %s110
      %p119 = scmp.eq.s32.totalorder %s20, 1
      %p120 = por %p118, %p119
      %p121 = scmp.ne.s32.totalorder %s110, %s111
      %p122 = scmp.eq.s32.totalorder %s20, 0
      %p123 = por %p121, %p122
      %p124 = scmp.ne.s32.totalorder %s110, %s111
      %p125 = scmp.eq.s32.totalorder %s21, 1
      %p126 = por %p124, %p125
      %p128 = scmp.ne.s32.totalorder %s111, %s127
      %p129 = scmp.eq.s32.totalorder %s21, 0
      %p130 = por %p128, %p129
      %p131 = scmp.le.s32.totalorder 1, %s15
      %p132 = scmp.lt.s32.totalorder %s15, 3
      %p133 = pnand %p131, %p132
      %p134 = pneg %p133
      // Predicated region
      $region9: #{tpu_custom_call.1} parent=5 // pred_check
        _
      $region10: #{tpu_custom_call.1} parent=5 // pred_check_branch
        %136 = sbr.rel (%p133) target = $region12
      $region11: #{tpu_custom_call.1} parent=5 // pred_region
        %s137 = ssub.s32 %s15, 1
        // Predicated region
        $region13: #{tpu_custom_call.1} parent=11 // pred_check
          %p138 = pneg %p76
        $region14: #{tpu_custom_call.1} parent=11 // pred_check_branch
          %140 = sbr.rel (%p138) target = $region16
        $region15: #{tpu_custom_call.1} parent=11 // pred_region
          _
        $region16: #{tpu_custom_call.1} parent=11 // pred_fallthru
          _
        // Predicated region
        $region17: #{tpu_custom_call.1} parent=11 // pred_check
          %p141 = pneg %p97
        $region18: #{tpu_custom_call.1} parent=11 // pred_check_branch
          %143 = sbr.rel (%p141) target = $region20
        $region19: #{tpu_custom_call.1} parent=11 // pred_region
          _
        $region20: #{tpu_custom_call.1} parent=11 // pred_fallthru
          _
      $region12: #{tpu_custom_call.1} parent=5 // pred_fallthru
        _
      %p144 = scmp.lt.s32.totalorder %s15, 2
      // Predicated region
      $region21: #{tpu_custom_call.1} parent=5 // pred_check
        %p145 = pneg %p144
      $region22: #{tpu_custom_call.1} parent=5 // pred_check_branch
        %147 = sbr.rel (%p145) target = $region24
      $region23: #{tpu_custom_call.1} parent=5 // pred_region
        // Predicated region
        $region25: #{tpu_custom_call.1} parent=23 // pred_check
          %p148 = pneg %p49
        $region26: #{tpu_custom_call.1} parent=23 // pred_check_branch
          %150 = sbr.rel (%p148) target = $region28
        $region27: #{tpu_custom_call.1} parent=23 // pred_region
          %s151 = sand.u32 %s39, 1
          %s152 = scalar_lea.sflag [#allocation5], %s151
          %s153 = sand.u32 %s39, 1
          %s154 = smul.addr %s153, 128
          %s155 = scalar_lea.vmem [#allocation4], %s154
          %s156 = smul.u32 2, %s23
          %s158 = ssub.s32 2048, 2048
          %159 = vsyncadd %s152, %s158
          %s160 = smul.addr %s22, 16
          %s161 = sadd.s32 %s156, %s160
          %s162 = smul.addr %s161, 128
          %s163 = scalar_lea.hbm %s0, %s162
          %s164 = sshll.u32 %s155, 4
          %s165 = int_to_ptr.vmem [resolvable:$true] %s164
          %170 = dma.hbm_to_vmem [thread:$0]  %s163, 2048, %s165, %s152, 256, 256, 16
        $region28: #{tpu_custom_call.1} parent=23 // pred_fallthru
          _
      $region24: #{tpu_custom_call.1} parent=5 // pred_fallthru
        _
      %p171 = scmp.le.s32.totalorder 1, %s15
      %p172 = scmp.lt.s32.totalorder %s15, 3
      %p173 = pnand %p171, %p172
      %p174 = pneg %p173
      // Predicated region
      $region29: #{tpu_custom_call.1} parent=5 // pred_check
        _
      $region30: #{tpu_custom_call.1} parent=5 // pred_check_branch
        %176 = sbr.rel (%p173) target = $region32
      $region31: #{tpu_custom_call.1} parent=5 // pred_region
        %s177 = ssub.s32 %s15, 1
        %s178 = sand.u32 %s42, 1
        %s179 = scalar_lea.sflag [#allocation5], %s178
        %s180 = sand.u32 %s42, 1
        %s181 = smul.addr %s180, 128
        %s182 = scalar_lea.vmem [#allocation4], %s181
        // Predicated region
        $region33: #{tpu_custom_call.1} parent=31 // pred_check
          %p183 = pneg %p55
        $region34: #{tpu_custom_call.1} parent=31 // pred_check_branch
          %185 = sbr.rel (%p183) target = $region36
        $region35: #{tpu_custom_call.1} parent=31 // pred_region
          %186 = dma.done %s179, 2048
        $region36: #{tpu_custom_call.1} parent=31 // pred_fallthru
          _
        %s187 = sand.u32 %s42, 1
        %s188 = scalar_lea.sflag [#allocation5], %s187
        %s189 = sand.u32 %s42, 1
        %s190 = smul.addr %s189, 128
        %s191 = scalar_lea.vmem [#allocation4], %s190
        %p192 = pneg %p55
        %p193 = pneg %p52
        %p194 = pneg %p76
        %p195 = pneg %p73
        %p196 = pneg %p97
        %p197 = pneg %p94
        %p198 = pneg %p123
        %p199 = pneg %p120
        %s200 = sand.u32 %s110, 1
        %s201 = scalar_lea.sflag [#allocation6], %s200
        %s202 = sand.u32 %s110, 1
        %s203 = scalar_lea.vmem [#allocation7], %s202
        %s204 = smul.u32 2, %s25
        %p205 = scmp.eq.s32.totalorder %s25, 0
        // Predicated region
        $region37: #{tpu_custom_call.1} parent=31 // pred_check
          %p206 = pneg %p205
        $region38: #{tpu_custom_call.1} parent=31 // pred_check_branch
          %208 = sbr.rel (%p206) target = $region40
        $region39: #{tpu_custom_call.1} parent=31 // pred_region
          %vm209 = vcmask 516096
          %210 = vst.msk [vmem:[#allocation2] sm:$0x1] %vm209, 0.0
          %211 = vst.msk [vmem:[#allocation3] sm:$0x1] %vm209, -inf
        $region40: #{tpu_custom_call.1} parent=31 // pred_fallthru
          _
        %v212 = vld [vmem:[%s182] sm:$0xff]
        %v213 = vld [vmem:[%s182 + $0x8] sm:$0xff]
        %v214 = vld [vmem:[%s182 + $0x10] sm:$0xff]
        %v215 = vld [vmem:[%s182 + $0x18] sm:$0xff]
        %v216 = vld [vmem:[%s182 + $0x20] sm:$0xff]
        %v217 = vld [vmem:[%s182 + $0x28] sm:$0xff]
        %v218 = vld [vmem:[%s182 + $0x30] sm:$0xff]
        %v219 = vld [vmem:[%s182 + $0x38] sm:$0xff]
        %v220 = vld [vmem:[%s182 + $0x40] sm:$0xff]
        %v221 = vld [vmem:[%s182 + $0x48] sm:$0xff]
        %v222 = vld [vmem:[%s182 + $0x50] sm:$0xff]
        %v223 = vld [vmem:[%s182 + $0x58] sm:$0xff]
        %v224 = vld [vmem:[%s182 + $0x60] sm:$0xff]
        %v225 = vld [vmem:[%s182 + $0x68] sm:$0xff]
        %v226 = vld [vmem:[%s182 + $0x70] sm:$0xff]
        %v227 = vld [vmem:[%s182 + $0x78] sm:$0xff]
        %v228 = vld [vmem:[#allocation2] sm:$0x1]
        %v229 = vadd.f32 %v212, %v213
        %230 = vadd.xlane.f32.xlu0 %v229
        %v231 = vpop.xlane.xlu0 %230
        %v232 = vadd.f32 %v214, %v215
        %233 = vadd.xlane.f32.xlu0 %v232
        %v234 = vpop.xlane.xlu0 %233
        %v235 = vadd.f32 %v216, %v217
        %236 = vadd.xlane.f32.xlu0 %v235
        %v237 = vpop.xlane.xlu0 %236
        %v238 = vadd.f32 %v218, %v219
        %239 = vadd.xlane.f32.xlu0 %v238
        %v240 = vpop.xlane.xlu0 %239
        %v241 = vadd.f32 %v220, %v221
        %242 = vadd.xlane.f32.xlu0 %v241
        %v243 = vpop.xlane.xlu0 %242
        %v244 = vadd.f32 %v222, %v223
        %245 = vadd.xlane.f32.xlu0 %v244
        %v246 = vpop.xlane.xlu0 %245
        %v247 = vadd.f32 %v224, %v225
        %248 = vadd.xlane.f32.xlu0 %v247
        %v249 = vpop.xlane.xlu0 %248
        %v250 = vadd.f32 %v226, %v227
        %251 = vadd.xlane.f32.xlu0 %v250
        %v252 = vpop.xlane.xlu0 %251
        %v261 = vlaneseq
        %v262 = vshrl.u32 %v261, 7
        %v263 = vsub.s32 0, %v262
        %v264 = vrot.slane %v231, %v263
        %v265 = vlaneseq
        %v266 = vshrl.u32 %v265, 7
        %v267 = vsub.s32 1, %v266
        %v268 = vrot.slane %v231, %v267
        %v269 = vlaneseq
        %v270 = vshrl.u32 %v269, 7
        %v271 = vsub.s32 2, %v270
        %v272 = vrot.slane %v231, %v271
        %v273 = vlaneseq
        %v274 = vshrl.u32 %v273, 7
        %v275 = vsub.s32 3, %v274
        %v276 = vrot.slane %v231, %v275
        %v277 = vlaneseq
        %v278 = vshrl.u32 %v277, 7
        %v279 = vsub.s32 4, %v278
        %v280 = vrot.slane %v231, %v279
        %v281 = vlaneseq
        %v282 = vshrl.u32 %v281, 7
        %v283 = vsub.s32 5, %v282
        %v284 = vrot.slane %v231, %v283
        %v285 = vlaneseq
        %v286 = vshrl.u32 %v285, 7
        %v287 = vsub.s32 6, %v286
        %v288 = vrot.slane %v231, %v287
        %v289 = vlaneseq
        %v290 = vshrl.u32 %v289, 7
        %v291 = vsub.s32 7, %v290
        %v292 = vrot.slane %v231, %v291
        %v293 = vlaneseq
        %v294 = vshrl.u32 %v293, 7
        %v295 = vsub.s32 0, %v294
        %v296 = vrot.slane %v234, %v295
        %v297 = vlaneseq
        %v298 = vshrl.u32 %v297, 7
        %v299 = vsub.s32 1, %v298
        %v300 = vrot.slane %v234, %v299
        %v301 = vlaneseq
        %v302 = vshrl.u32 %v301, 7
        %v303 = vsub.s32 2, %v302
        %v304 = vrot.slane %v234, %v303
        %v305 = vlaneseq
        %v306 = vshrl.u32 %v305, 7
        %v307 = vsub.s32 3, %v306
        %v308 = vrot.slane %v234, %v307
        %v309 = vlaneseq
        %v310 = vshrl.u32 %v309, 7
        %v311 = vsub.s32 4, %v310
        %v312 = vrot.slane %v234, %v311
        %v313 = vlaneseq
        %v314 = vshrl.u32 %v313, 7
        %v315 = vsub.s32 5, %v314
        %v316 = vrot.slane %v234, %v315
        %v317 = vlaneseq
        %v318 = vshrl.u32 %v317, 7
        %v319 = vsub.s32 6, %v318
        %v320 = vrot.slane %v234, %v319
        %v321 = vlaneseq
        %v322 = vshrl.u32 %v321, 7
        %v323 = vsub.s32 7, %v322
        %v324 = vrot.slane %v234, %v323
        %v325 = vlaneseq
        %v326 = vshrl.u32 %v325, 7
        %v327 = vsub.s32 0, %v326
        %v328 = vrot.slane %v237, %v327
        %v329 = vlaneseq
        %v330 = vshrl.u32 %v329, 7
        %v331 = vsub.s32 1, %v330
        %v332 = vrot.slane %v237, %v331
        %v333 = vlaneseq
        %v334 = vshrl.u32 %v333, 7
        %v335 = vsub.s32 2, %v334
        %v336 = vrot.slane %v237, %v335
        %v337 = vlaneseq
        %v338 = vshrl.u32 %v337, 7
        %v339 = vsub.s32 3, %v338
        %v340 = vrot.slane %v237, %v339
        %v341 = vlaneseq
        %v342 = vshrl.u32 %v341, 7
        %v343 = vsub.s32 4, %v342
        %v344 = vrot.slane %v237, %v343
        %v345 = vlaneseq
        %v346 = vshrl.u32 %v345, 7
        %v347 = vsub.s32 5, %v346
        %v348 = vrot.slane %v237, %v347
        %v349 = vlaneseq
        %v350 = vshrl.u32 %v349, 7
        %v351 = vsub.s32 6, %v350
        %v352 = vrot.slane %v237, %v351
        %v353 = vlaneseq
        %v354 = vshrl.u32 %v353, 7
        %v355 = vsub.s32 7, %v354
        %v356 = vrot.slane %v237, %v355
        %v357 = vlaneseq
        %v358 = vshrl.u32 %v357, 7
        %v359 = vsub.s32 0, %v358
        %v360 = vrot.slane %v240, %v359
        %v361 = vlaneseq
        %v362 = vshrl.u32 %v361, 7
        %v363 = vsub.s32 1, %v362
        %v364 = vrot.slane %v240, %v363
        %v365 = vlaneseq
        %v366 = vshrl.u32 %v365, 7
        %v367 = vsub.s32 2, %v366
        %v368 = vrot.slane %v240, %v367
        %v369 = vlaneseq
        %v370 = vshrl.u32 %v369, 7
        %v371 = vsub.s32 3, %v370
        %v372 = vrot.slane %v240, %v371
        %v373 = vlaneseq
        %v374 = vshrl.u32 %v373, 7
        %v375 = vsub.s32 4, %v374
        %v376 = vrot.slane %v240, %v375
        %v377 = vlaneseq
        %v378 = vshrl.u32 %v377, 7
        %v379 = vsub.s32 5, %v378
        %v380 = vrot.slane %v240, %v379
        %v381 = vlaneseq
        %v382 = vshrl.u32 %v381, 7
        %v383 = vsub.s32 6, %v382
        %v384 = vrot.slane %v240, %v383
        %v385 = vlaneseq
        %v386 = vshrl.u32 %v385, 7
        %v387 = vsub.s32 7, %v386
        %v388 = vrot.slane %v240, %v387
        %v389 = vlaneseq
        %v390 = vshrl.u32 %v389, 7
        %v391 = vsub.s32 0, %v390
        %v392 = vrot.slane %v243, %v391
        %v393 = vlaneseq
        %v394 = vshrl.u32 %v393, 7
        %v395 = vsub.s32 1, %v394
        %v396 = vrot.slane %v243, %v395
        %v397 = vlaneseq
        %v398 = vshrl.u32 %v397, 7
        %v399 = vsub.s32 2, %v398
        %v400 = vrot.slane %v243, %v399
        %v401 = vlaneseq
        %v402 = vshrl.u32 %v401, 7
        %v403 = vsub.s32 3, %v402
        %v404 = vrot.slane %v243, %v403
        %v405 = vlaneseq
        %v406 = vshrl.u32 %v405, 7
        %v407 = vsub.s32 4, %v406
        %v408 = vrot.slane %v243, %v407
        %v409 = vlaneseq
        %v410 = vshrl.u32 %v409, 7
        %v411 = vsub.s32 5, %v410
        %v412 = vrot.slane %v243, %v411
        %v413 = vlaneseq
        %v414 = vshrl.u32 %v413, 7
        %v415 = vsub.s32 6, %v414
        %v416 = vrot.slane %v243, %v415
        %v417 = vlaneseq
        %v418 = vshrl.u32 %v417, 7
        %v419 = vsub.s32 7, %v418
        %v420 = vrot.slane %v243, %v419
        %v421 = vlaneseq
        %v422 = vshrl.u32 %v421, 7
        %v423 = vsub.s32 0, %v422
        %v424 = vrot.slane %v246, %v423
        %v425 = vlaneseq
        %v426 = vshrl.u32 %v425, 7
        %v427 = vsub.s32 1, %v426
        %v428 = vrot.slane %v246, %v427
        %v429 = vlaneseq
        %v430 = vshrl.u32 %v429, 7
        %v431 = vsub.s32 2, %v430
        %v432 = vrot.slane %v246, %v431
        %v433 = vlaneseq
        %v434 = vshrl.u32 %v433, 7
        %v435 = vsub.s32 3, %v434
        %v436 = vrot.slane %v246, %v435
        %v437 = vlaneseq
        %v438 = vshrl.u32 %v437, 7
        %v439 = vsub.s32 4, %v438
        %v440 = vrot.slane %v246, %v439
        %v441 = vlaneseq
        %v442 = vshrl.u32 %v441, 7
        %v443 = vsub.s32 5, %v442
        %v444 = vrot.slane %v246, %v443
        %v445 = vlaneseq
        %v446 = vshrl.u32 %v445, 7
        %v447 = vsub.s32 6, %v446
        %v448 = vrot.slane %v246, %v447
        %v449 = vlaneseq
        %v450 = vshrl.u32 %v449, 7
        %v451 = vsub.s32 7, %v450
        %v452 = vrot.slane %v246, %v451
        %v453 = vlaneseq
        %v454 = vshrl.u32 %v453, 7
        %v455 = vsub.s32 0, %v454
        %v456 = vrot.slane %v249, %v455
        %v457 = vlaneseq
        %v458 = vshrl.u32 %v457, 7
        %v459 = vsub.s32 1, %v458
        %v460 = vrot.slane %v249, %v459
        %v461 = vlaneseq
        %v462 = vshrl.u32 %v461, 7
        %v463 = vsub.s32 2, %v462
        %v464 = vrot.slane %v249, %v463
        %v465 = vlaneseq
        %v466 = vshrl.u32 %v465, 7
        %v467 = vsub.s32 3, %v466
        %v468 = vrot.slane %v249, %v467
        %v469 = vlaneseq
        %v470 = vshrl.u32 %v469, 7
        %v471 = vsub.s32 4, %v470
        %v472 = vrot.slane %v249, %v471
        %v473 = vlaneseq
        %v474 = vshrl.u32 %v473, 7
        %v475 = vsub.s32 5, %v474
        %v476 = vrot.slane %v249, %v475
        %v477 = vlaneseq
        %v478 = vshrl.u32 %v477, 7
        %v479 = vsub.s32 6, %v478
        %v480 = vrot.slane %v249, %v479
        %v481 = vlaneseq
        %v482 = vshrl.u32 %v481, 7
        %v483 = vsub.s32 7, %v482
        %v484 = vrot.slane %v249, %v483
        %v485 = vlaneseq
        %v486 = vshrl.u32 %v485, 7
        %v487 = vsub.s32 0, %v486
        %v488 = vrot.slane %v252, %v487
        %v489 = vlaneseq
        %v490 = vshrl.u32 %v489, 7
        %v491 = vsub.s32 1, %v490
        %v492 = vrot.slane %v252, %v491
        %v493 = vlaneseq
        %v494 = vshrl.u32 %v493, 7
        %v495 = vsub.s32 2, %v494
        %v496 = vrot.slane %v252, %v495
        %v497 = vlaneseq
        %v498 = vshrl.u32 %v497, 7
        %v499 = vsub.s32 3, %v498
        %v500 = vrot.slane %v252, %v499
        %v501 = vlaneseq
        %v502 = vshrl.u32 %v501, 7
        %v503 = vsub.s32 4, %v502
        %v504 = vrot.slane %v252, %v503
        %v505 = vlaneseq
        %v506 = vshrl.u32 %v505, 7
        %v507 = vsub.s32 5, %v506
        %v508 = vrot.slane %v252, %v507
        %v509 = vlaneseq
        %v510 = vshrl.u32 %v509, 7
        %v511 = vsub.s32 6, %v510
        %v512 = vrot.slane %v252, %v511
        %v513 = vlaneseq
        %v514 = vshrl.u32 %v513, 7
        %v515 = vsub.s32 7, %v514
        %v516 = vrot.slane %v252, %v515
        %v517 = vcombine.low %v264, %v268
        %v518 = vcombine.low %v272, %v276
        %v519 = vcombine.low %v280, %v284
        %v520 = vcombine.low %v288, %v292
        %v522 = vunpack.c.l.s4 1966171168
        %v523 = vunpack.c.0.s8 %v522
        %v524 = vlaneseq
        %v525 = vshrl.u32 %v524, 7
        %v526 = vsub.s32 %v523, %v525
        %v527 = vrot.slane %v517, %v526
        %v529 = vunpack.c.l.s4 1966171168
        %v530 = vunpack.c.0.s8 %v529
        %v531 = vlaneseq
        %v532 = vshrl.u32 %v531, 7
        %v533 = vsub.s32 %v530, %v532
        %v534 = vrot.slane %v518, %v533
        %v536 = vunpack.c.l.s4 1966171168
        %v537 = vunpack.c.0.s8 %v536
        %v538 = vlaneseq
        %v539 = vshrl.u32 %v538, 7
        %v540 = vsub.s32 %v537, %v539
        %v541 = vrot.slane %v519, %v540
        %v543 = vunpack.c.l.s4 1966171168
        %v544 = vunpack.c.0.s8 %v543
        %v545 = vlaneseq
        %v546 = vshrl.u32 %v545, 7
        %v547 = vsub.s32 %v544, %v546
        %v548 = vrot.slane %v520, %v547
        %v549 = vcombine.low %v527, %v534
        %v550 = vcombine.low %v541, %v548
        %v552 = vunpack.c.l.s4 1966171168
        %v553 = vunpack.c.0.s8 %v552
        %v554 = vlaneseq
        %v555 = vshrl.u32 %v554, 7
        %v556 = vsub.s32 %v553, %v555
        %v557 = vrot.slane %v549, %v556
        %v559 = vunpack.c.l.s4 1966171168
        %v560 = vunpack.c.0.s8 %v559
        %v561 = vlaneseq
        %v562 = vshrl.u32 %v561, 7
        %v563 = vsub.s32 %v560, %v562
        %v564 = vrot.slane %v550, %v563
        %v565 = vcombine.low %v557, %v564
        %v566 = vcombine.low %v296, %v300
        %v567 = vcombine.low %v304, %v308
        %v568 = vcombine.low %v312, %v316
        %v569 = vcombine.low %v320, %v324
        %v571 = vunpack.c.l.s4 1966171168
        %v572 = vunpack.c.0.s8 %v571
        %v573 = vlaneseq
        %v574 = vshrl.u32 %v573, 7
        %v575 = vsub.s32 %v572, %v574
        %v576 = vrot.slane %v566, %v575
        %v578 = vunpack.c.l.s4 1966171168
        %v579 = vunpack.c.0.s8 %v578
        %v580 = vlaneseq
        %v581 = vshrl.u32 %v580, 7
        %v582 = vsub.s32 %v579, %v581
        %v583 = vrot.slane %v567, %v582
        %v585 = vunpack.c.l.s4 1966171168
        %v586 = vunpack.c.0.s8 %v585
        %v587 = vlaneseq
        %v588 = vshrl.u32 %v587, 7
        %v589 = vsub.s32 %v586, %v588
        %v590 = vrot.slane %v568, %v589
        %v592 = vunpack.c.l.s4 1966171168
        %v593 = vunpack.c.0.s8 %v592
        %v594 = vlaneseq
        %v595 = vshrl.u32 %v594, 7
        %v596 = vsub.s32 %v593, %v595
        %v597 = vrot.slane %v569, %v596
        %v598 = vcombine.low %v576, %v583
        %v599 = vcombine.low %v590, %v597
        %v601 = vunpack.c.l.s4 1966171168
        %v602 = vunpack.c.0.s8 %v601
        %v603 = vlaneseq
        %v604 = vshrl.u32 %v603, 7
        %v605 = vsub.s32 %v602, %v604
        %v606 = vrot.slane %v598, %v605
        %v608 = vunpack.c.l.s4 1966171168
        %v609 = vunpack.c.0.s8 %v608
        %v610 = vlaneseq
        %v611 = vshrl.u32 %v610, 7
        %v612 = vsub.s32 %v609, %v611
        %v613 = vrot.slane %v599, %v612
        %v614 = vcombine.low %v606, %v613
        %v615 = vcombine.low %v328, %v332
        %v616 = vcombine.low %v336, %v340
        %v617 = vcombine.low %v344, %v348
        %v618 = vcombine.low %v352, %v356
        %v620 = vunpack.c.l.s4 1966171168
        %v621 = vunpack.c.0.s8 %v620
        %v622 = vlaneseq
        %v623 = vshrl.u32 %v622, 7
        %v624 = vsub.s32 %v621, %v623
        %v625 = vrot.slane %v615, %v624
        %v627 = vunpack.c.l.s4 1966171168
        %v628 = vunpack.c.0.s8 %v627
        %v629 = vlaneseq
        %v630 = vshrl.u32 %v629, 7
        %v631 = vsub.s32 %v628, %v630
        %v632 = vrot.slane %v616, %v631
        %v634 = vunpack.c.l.s4 1966171168
        %v635 = vunpack.c.0.s8 %v634
        %v636 = vlaneseq
        %v637 = vshrl.u32 %v636, 7
        %v638 = vsub.s32 %v635, %v637
        %v639 = vrot.slane %v617, %v638
        %v641 = vunpack.c.l.s4 1966171168
        %v642 = vunpack.c.0.s8 %v641
        %v643 = vlaneseq
        %v644 = vshrl.u32 %v643, 7
        %v645 = vsub.s32 %v642, %v644
        %v646 = vrot.slane %v618, %v645
        %v647 = vcombine.low %v625, %v632
        %v648 = vcombine.low %v639, %v646
        %v650 = vunpack.c.l.s4 1966171168
        %v651 = vunpack.c.0.s8 %v650
        %v652 = vlaneseq
        %v653 = vshrl.u32 %v652, 7
        %v654 = vsub.s32 %v651, %v653
        %v655 = vrot.slane %v647, %v654
        %v657 = vunpack.c.l.s4 1966171168
        %v658 = vunpack.c.0.s8 %v657
        %v659 = vlaneseq
        %v660 = vshrl.u32 %v659, 7
        %v661 = vsub.s32 %v658, %v660
        %v662 = vrot.slane %v648, %v661
        %v663 = vcombine.low %v655, %v662
        %v664 = vcombine.low %v360, %v364
        %v665 = vcombine.low %v368, %v372
        %v666 = vcombine.low %v376, %v380
        %v667 = vcombine.low %v384, %v388
        %v669 = vunpack.c.l.s4 1966171168
        %v670 = vunpack.c.0.s8 %v669
        %v671 = vlaneseq
        %v672 = vshrl.u32 %v671, 7
        %v673 = vsub.s32 %v670, %v672
        %v674 = vrot.slane %v664, %v673
        %v676 = vunpack.c.l.s4 1966171168
        %v677 = vunpack.c.0.s8 %v676
        %v678 = vlaneseq
        %v679 = vshrl.u32 %v678, 7
        %v680 = vsub.s32 %v677, %v679
        %v681 = vrot.slane %v665, %v680
        %v683 = vunpack.c.l.s4 1966171168
        %v684 = vunpack.c.0.s8 %v683
        %v685 = vlaneseq
        %v686 = vshrl.u32 %v685, 7
        %v687 = vsub.s32 %v684, %v686
        %v688 = vrot.slane %v666, %v687
        %v690 = vunpack.c.l.s4 1966171168
        %v691 = vunpack.c.0.s8 %v690
        %v692 = vlaneseq
        %v693 = vshrl.u32 %v692, 7
        %v694 = vsub.s32 %v691, %v693
        %v695 = vrot.slane %v667, %v694
        %v696 = vcombine.low %v674, %v681
        %v697 = vcombine.low %v688, %v695
        %v699 = vunpack.c.l.s4 1966171168
        %v700 = vunpack.c.0.s8 %v699
        %v701 = vlaneseq
        %v702 = vshrl.u32 %v701, 7
        %v703 = vsub.s32 %v700, %v702
        %v704 = vrot.slane %v696, %v703
        %v706 = vunpack.c.l.s4 1966171168
        %v707 = vunpack.c.0.s8 %v706
        %v708 = vlaneseq
        %v709 = vshrl.u32 %v708, 7
        %v710 = vsub.s32 %v707, %v709
        %v711 = vrot.slane %v697, %v710
        %v712 = vcombine.low %v704, %v711
        %v713 = vcombine.low %v392, %v396
        %v714 = vcombine.low %v400, %v404
        %v715 = vcombine.low %v408, %v412
        %v716 = vcombine.low %v416, %v420
        %v718 = vunpack.c.l.s4 1966171168
        %v719 = vunpack.c.0.s8 %v718
        %v720 = vlaneseq
        %v721 = vshrl.u32 %v720, 7
        %v722 = vsub.s32 %v719, %v721
        %v723 = vrot.slane %v713, %v722
        %v725 = vunpack.c.l.s4 1966171168
        %v726 = vunpack.c.0.s8 %v725
        %v727 = vlaneseq
        %v728 = vshrl.u32 %v727, 7
        %v729 = vsub.s32 %v726, %v728
        %v730 = vrot.slane %v714, %v729
        %v732 = vunpack.c.l.s4 1966171168
        %v733 = vunpack.c.0.s8 %v732
        %v734 = vlaneseq
        %v735 = vshrl.u32 %v734, 7
        %v736 = vsub.s32 %v733, %v735
        %v737 = vrot.slane %v715, %v736
        %v739 = vunpack.c.l.s4 1966171168
        %v740 = vunpack.c.0.s8 %v739
        %v741 = vlaneseq
        %v742 = vshrl.u32 %v741, 7
        %v743 = vsub.s32 %v740, %v742
        %v744 = vrot.slane %v716, %v743
        %v745 = vcombine.low %v723, %v730
        %v746 = vcombine.low %v737, %v744
        %v748 = vunpack.c.l.s4 1966171168
        %v749 = vunpack.c.0.s8 %v748
        %v750 = vlaneseq
        %v751 = vshrl.u32 %v750, 7
        %v752 = vsub.s32 %v749, %v751
        %v753 = vrot.slane %v745, %v752
        %v755 = vunpack.c.l.s4 1966171168
        %v756 = vunpack.c.0.s8 %v755
        %v757 = vlaneseq
        %v758 = vshrl.u32 %v757, 7
        %v759 = vsub.s32 %v756, %v758
        %v760 = vrot.slane %v746, %v759
        %v761 = vcombine.low %v753, %v760
        %v762 = vcombine.low %v424, %v428
        %v763 = vcombine.low %v432, %v436
        %v764 = vcombine.low %v440, %v444
        %v765 = vcombine.low %v448, %v452
        %v767 = vunpack.c.l.s4 1966171168
        %v768 = vunpack.c.0.s8 %v767
        %v769 = vlaneseq
        %v770 = vshrl.u32 %v769, 7
        %v771 = vsub.s32 %v768, %v770
        %v772 = vrot.slane %v762, %v771
        %v774 = vunpack.c.l.s4 1966171168
        %v775 = vunpack.c.0.s8 %v774
        %v776 = vlaneseq
        %v777 = vshrl.u32 %v776, 7
        %v778 = vsub.s32 %v775, %v777
        %v779 = vrot.slane %v763, %v778
        %v781 = vunpack.c.l.s4 1966171168
        %v782 = vunpack.c.0.s8 %v781
        %v783 = vlaneseq
        %v784 = vshrl.u32 %v783, 7
        %v785 = vsub.s32 %v782, %v784
        %v786 = vrot.slane %v764, %v785
        %v788 = vunpack.c.l.s4 1966171168
        %v789 = vunpack.c.0.s8 %v788
        %v790 = vlaneseq
        %v791 = vshrl.u32 %v790, 7
        %v792 = vsub.s32 %v789, %v791
        %v793 = vrot.slane %v765, %v792
        %v794 = vcombine.low %v772, %v779
        %v795 = vcombine.low %v786, %v793
        %v797 = vunpack.c.l.s4 1966171168
        %v798 = vunpack.c.0.s8 %v797
        %v799 = vlaneseq
        %v800 = vshrl.u32 %v799, 7
        %v801 = vsub.s32 %v798, %v800
        %v802 = vrot.slane %v794, %v801
        %v804 = vunpack.c.l.s4 1966171168
        %v805 = vunpack.c.0.s8 %v804
        %v806 = vlaneseq
        %v807 = vshrl.u32 %v806, 7
        %v808 = vsub.s32 %v805, %v807
        %v809 = vrot.slane %v795, %v808
        %v810 = vcombine.low %v802, %v809
        %v811 = vcombine.low %v456, %v460
        %v812 = vcombine.low %v464, %v468
        %v813 = vcombine.low %v472, %v476
        %v814 = vcombine.low %v480, %v484
        %v816 = vunpack.c.l.s4 1966171168
        %v817 = vunpack.c.0.s8 %v816
        %v818 = vlaneseq
        %v819 = vshrl.u32 %v818, 7
        %v820 = vsub.s32 %v817, %v819
        %v821 = vrot.slane %v811, %v820
        %v823 = vunpack.c.l.s4 1966171168
        %v824 = vunpack.c.0.s8 %v823
        %v825 = vlaneseq
        %v826 = vshrl.u32 %v825, 7
        %v827 = vsub.s32 %v824, %v826
        %v828 = vrot.slane %v812, %v827
        %v830 = vunpack.c.l.s4 1966171168
        %v831 = vunpack.c.0.s8 %v830
        %v832 = vlaneseq
        %v833 = vshrl.u32 %v832, 7
        %v834 = vsub.s32 %v831, %v833
        %v835 = vrot.slane %v813, %v834
        %v837 = vunpack.c.l.s4 1966171168
        %v838 = vunpack.c.0.s8 %v837
        %v839 = vlaneseq
        %v840 = vshrl.u32 %v839, 7
        %v841 = vsub.s32 %v838, %v840
        %v842 = vrot.slane %v814, %v841
        %v843 = vcombine.low %v821, %v828
        %v844 = vcombine.low %v835, %v842
        %v846 = vunpack.c.l.s4 1966171168
        %v847 = vunpack.c.0.s8 %v846
        %v848 = vlaneseq
        %v849 = vshrl.u32 %v848, 7
        %v850 = vsub.s32 %v847, %v849
        %v851 = vrot.slane %v843, %v850
        %v853 = vunpack.c.l.s4 1966171168
        %v854 = vunpack.c.0.s8 %v853
        %v855 = vlaneseq
        %v856 = vshrl.u32 %v855, 7
        %v857 = vsub.s32 %v854, %v856
        %v858 = vrot.slane %v844, %v857
        %v859 = vcombine.low %v851, %v858
        %v860 = vcombine.low %v488, %v492
        %v861 = vcombine.low %v496, %v500
        %v862 = vcombine.low %v504, %v508
        %v863 = vcombine.low %v512, %v516
        %v865 = vunpack.c.l.s4 1966171168
        %v866 = vunpack.c.0.s8 %v865
        %v867 = vlaneseq
        %v868 = vshrl.u32 %v867, 7
        %v869 = vsub.s32 %v866, %v868
        %v870 = vrot.slane %v860, %v869
        %v872 = vunpack.c.l.s4 1966171168
        %v873 = vunpack.c.0.s8 %v872
        %v874 = vlaneseq
        %v875 = vshrl.u32 %v874, 7
        %v876 = vsub.s32 %v873, %v875
        %v877 = vrot.slane %v861, %v876
        %v879 = vunpack.c.l.s4 1966171168
        %v880 = vunpack.c.0.s8 %v879
        %v881 = vlaneseq
        %v882 = vshrl.u32 %v881, 7
        %v883 = vsub.s32 %v880, %v882
        %v884 = vrot.slane %v862, %v883
        %v886 = vunpack.c.l.s4 1966171168
        %v887 = vunpack.c.0.s8 %v886
        %v888 = vlaneseq
        %v889 = vshrl.u32 %v888, 7
        %v890 = vsub.s32 %v887, %v889
        %v891 = vrot.slane %v863, %v890
        %v892 = vcombine.low %v870, %v877
        %v893 = vcombine.low %v884, %v891
        %v895 = vunpack.c.l.s4 1966171168
        %v896 = vunpack.c.0.s8 %v895
        %v897 = vlaneseq
        %v898 = vshrl.u32 %v897, 7
        %v899 = vsub.s32 %v896, %v898
        %v900 = vrot.slane %v892, %v899
        %v902 = vunpack.c.l.s4 1966171168
        %v903 = vunpack.c.0.s8 %v902
        %v904 = vlaneseq
        %v905 = vshrl.u32 %v904, 7
        %v906 = vsub.s32 %v903, %v905
        %v907 = vrot.slane %v893, %v906
        %v908 = vcombine.low %v900, %v907
        %909 = vset.pattern.permute.xlu0 0
        %910 = vperm.xlu0 %909, %v565
        %v911 = vpop.permute.xlu0 %910
        %912 = vset.pattern.permute.xlu0 0
        %913 = vperm.xlu0 %912, %v614
        %v914 = vpop.permute.xlu0 %913
        %915 = vset.pattern.permute.xlu0 0
        %916 = vperm.xlu0 %915, %v663
        %v917 = vpop.permute.xlu0 %916
        %918 = vset.pattern.permute.xlu0 0
        %919 = vperm.xlu0 %918, %v712
        %v920 = vpop.permute.xlu0 %919
        %921 = vset.pattern.permute.xlu0 0
        %922 = vperm.xlu0 %921, %v761
        %v923 = vpop.permute.xlu0 %922
        %924 = vset.pattern.permute.xlu0 0
        %925 = vperm.xlu0 %924, %v810
        %v926 = vpop.permute.xlu0 %925
        %927 = vset.pattern.permute.xlu0 0
        %928 = vperm.xlu0 %927, %v859
        %v929 = vpop.permute.xlu0 %928
        %930 = vset.pattern.permute.xlu0 0
        %931 = vperm.xlu0 %930, %v908
        %v932 = vpop.permute.xlu0 %931
        %v933 = vlaneseq
        %v934 = vand.u32 %v933, 127
        %v935 = vlaneseq
        %v936 = vshrl.u32 %v935, 7
        %v937 = vsub.s32 %v934, %v936
        %v938 = vrot.slane %v911, %v937
        %v939 = vadd.s32 %v934, 4294967288
        %v940 = vlaneseq
        %v941 = vshrl.u32 %v940, 7
        %v942 = vsub.s32 %v939, %v941
        %v943 = vrot.slane %v914, %v942
        %vm944 = vcmask 130112
        %v945 = vsel %vm944, %v943, %v938
        %v946 = vadd.s32 %v934, 4294967280
        %v947 = vlaneseq
        %v948 = vshrl.u32 %v947, 7
        %v949 = vsub.s32 %v946, %v948
        %v950 = vrot.slane %v917, %v949
        %vm951 = vcmask 195712
        %v952 = vsel %vm951, %v950, %v945
        %v953 = vadd.s32 %v934, 4294967272
        %v954 = vlaneseq
        %v955 = vshrl.u32 %v954, 7
        %v956 = vsub.s32 %v953, %v955
        %v957 = vrot.slane %v920, %v956
        %vm958 = vcmask 261312
        %v959 = vsel %vm958, %v957, %v952
        %v960 = vadd.s32 %v934, 4294967264
        %v961 = vlaneseq
        %v962 = vshrl.u32 %v961, 7
        %v963 = vsub.s32 %v960, %v962
        %v964 = vrot.slane %v923, %v963
        %vm965 = vcmask 326912
        %v966 = vsel %vm965, %v964, %v959
        %v967 = vadd.s32 %v934, 4294967256
        %v968 = vlaneseq
        %v969 = vshrl.u32 %v968, 7
        %v970 = vsub.s32 %v967, %v969
        %v971 = vrot.slane %v926, %v970
        %vm972 = vcmask 392512
        %v973 = vsel %vm972, %v971, %v966
        %v974 = vadd.s32 %v934, 4294967248
        %v975 = vlaneseq
        %v976 = vshrl.u32 %v975, 7
        %v977 = vsub.s32 %v974, %v976
        %v978 = vrot.slane %v929, %v977
        %vm979 = vcmask 458112
        %v980 = vsel %vm979, %v978, %v973
        %v981 = vadd.s32 %v934, 4294967240
        %v982 = vlaneseq
        %v983 = vshrl.u32 %v982, 7
        %v984 = vsub.s32 %v981, %v983
        %v985 = vrot.slane %v932, %v984
        %vm986 = vcmask 523712
        %v987 = vsel %vm986, %v985, %v980
        %v989 = vunpack.c.l.s4 1966171168
        %v990 = vunpack.c.0.s8 %v989
        %v991 = vlaneseq
        %v992 = vshrl.u32 %v991, 7
        %v993 = vsub.s32 %v990, %v992
        %v994 = vrot.slane %v987, %v993
        %v996 = vunpack.c.l.s4 1966171168
        %v997 = vunpack.c.0.s8 %v996
        %v998 = vlaneseq
        %v999 = vshrl.u32 %v998, 7
        %v1000 = vsub.s32 %v997, %v999
        %v1001 = vrot.slane %v994, %v1000
        %v1003 = vadd.f32 %v228, %v1001
        %vm1004 = vcmask 516096
        %1005 = vst.msk [vmem:[#allocation2] sm:$0x1] %vm1004, %v1003
        %v1006 = vld [vmem:[#allocation3] sm:$0x1]
        %v1007 = vmax.f32 %v212, %v213
        %1008 = vmax.xlane.f32.xlu0 %v1007
        %v1009 = vpop.xlane.xlu0 %1008
        %v1010 = vmax.f32 %v214, %v215
        %1011 = vmax.xlane.f32.xlu0 %v1010
        %v1012 = vpop.xlane.xlu0 %1011
        %v1013 = vmax.f32 %v216, %v217
        %1014 = vmax.xlane.f32.xlu0 %v1013
        %v1015 = vpop.xlane.xlu0 %1014
        %v1016 = vmax.f32 %v218, %v219
        %1017 = vmax.xlane.f32.xlu0 %v1016
        %v1018 = vpop.xlane.xlu0 %1017
        %v1019 = vmax.f32 %v220, %v221
        %1020 = vmax.xlane.f32.xlu0 %v1019
        %v1021 = vpop.xlane.xlu0 %1020
        %v1022 = vmax.f32 %v222, %v223
        %1023 = vmax.xlane.f32.xlu0 %v1022
        %v1024 = vpop.xlane.xlu0 %1023
        %v1025 = vmax.f32 %v224, %v225
        %1026 = vmax.xlane.f32.xlu0 %v1025
        %v1027 = vpop.xlane.xlu0 %1026
        %v1028 = vmax.f32 %v226, %v227
        %1029 = vmax.xlane.f32.xlu0 %v1028
        %v1030 = vpop.xlane.xlu0 %1029
        %v1039 = vlaneseq
        %v1040 = vshrl.u32 %v1039, 7
        %v1041 = vsub.s32 0, %v1040
        %v1042 = vrot.slane %v1009, %v1041
        %v1043 = vlaneseq
        %v1044 = vshrl.u32 %v1043, 7
        %v1045 = vsub.s32 1, %v1044
        %v1046 = vrot.slane %v1009, %v1045
        %v1047 = vlaneseq
        %v1048 = vshrl.u32 %v1047, 7
        %v1049 = vsub.s32 2, %v1048
        %v1050 = vrot.slane %v1009, %v1049
        %v1051 = vlaneseq
        %v1052 = vshrl.u32 %v1051, 7
        %v1053 = vsub.s32 3, %v1052
        %v1054 = vrot.slane %v1009, %v1053
        %v1055 = vlaneseq
        %v1056 = vshrl.u32 %v1055, 7
        %v1057 = vsub.s32 4, %v1056
        %v1058 = vrot.slane %v1009, %v1057
        %v1059 = vlaneseq
        %v1060 = vshrl.u32 %v1059, 7
        %v1061 = vsub.s32 5, %v1060
        %v1062 = vrot.slane %v1009, %v1061
        %v1063 = vlaneseq
        %v1064 = vshrl.u32 %v1063, 7
        %v1065 = vsub.s32 6, %v1064
        %v1066 = vrot.slane %v1009, %v1065
        %v1067 = vlaneseq
        %v1068 = vshrl.u32 %v1067, 7
        %v1069 = vsub.s32 7, %v1068
        %v1070 = vrot.slane %v1009, %v1069
        %v1071 = vlaneseq
        %v1072 = vshrl.u32 %v1071, 7
        %v1073 = vsub.s32 0, %v1072
        %v1074 = vrot.slane %v1012, %v1073
        %v1075 = vlaneseq
        %v1076 = vshrl.u32 %v1075, 7
        %v1077 = vsub.s32 1, %v1076
        %v1078 = vrot.slane %v1012, %v1077
        %v1079 = vlaneseq
        %v1080 = vshrl.u32 %v1079, 7
        %v1081 = vsub.s32 2, %v1080
        %v1082 = vrot.slane %v1012, %v1081
        %v1083 = vlaneseq
        %v1084 = vshrl.u32 %v1083, 7
        %v1085 = vsub.s32 3, %v1084
        %v1086 = vrot.slane %v1012, %v1085
        %v1087 = vlaneseq
        %v1088 = vshrl.u32 %v1087, 7
        %v1089 = vsub.s32 4, %v1088
        %v1090 = vrot.slane %v1012, %v1089
        %v1091 = vlaneseq
        %v1092 = vshrl.u32 %v1091, 7
        %v1093 = vsub.s32 5, %v1092
        %v1094 = vrot.slane %v1012, %v1093
        %v1095 = vlaneseq
        %v1096 = vshrl.u32 %v1095, 7
        %v1097 = vsub.s32 6, %v1096
        %v1098 = vrot.slane %v1012, %v1097
        %v1099 = vlaneseq
        %v1100 = vshrl.u32 %v1099, 7
        %v1101 = vsub.s32 7, %v1100
        %v1102 = vrot.slane %v1012, %v1101
        %v1103 = vlaneseq
        %v1104 = vshrl.u32 %v1103, 7
        %v1105 = vsub.s32 0, %v1104
        %v1106 = vrot.slane %v1015, %v1105
        %v1107 = vlaneseq
        %v1108 = vshrl.u32 %v1107, 7
        %v1109 = vsub.s32 1, %v1108
        %v1110 = vrot.slane %v1015, %v1109
        %v1111 = vlaneseq
        %v1112 = vshrl.u32 %v1111, 7
        %v1113 = vsub.s32 2, %v1112
        %v1114 = vrot.slane %v1015, %v1113
        %v1115 = vlaneseq
        %v1116 = vshrl.u32 %v1115, 7
        %v1117 = vsub.s32 3, %v1116
        %v1118 = vrot.slane %v1015, %v1117
        %v1119 = vlaneseq
        %v1120 = vshrl.u32 %v1119, 7
        %v1121 = vsub.s32 4, %v1120
        %v1122 = vrot.slane %v1015, %v1121
        %v1123 = vlaneseq
        %v1124 = vshrl.u32 %v1123, 7
        %v1125 = vsub.s32 5, %v1124
        %v1126 = vrot.slane %v1015, %v1125
        %v1127 = vlaneseq
        %v1128 = vshrl.u32 %v1127, 7
        %v1129 = vsub.s32 6, %v1128
        %v1130 = vrot.slane %v1015, %v1129
        %v1131 = vlaneseq
        %v1132 = vshrl.u32 %v1131, 7
        %v1133 = vsub.s32 7, %v1132
        %v1134 = vrot.slane %v1015, %v1133
        %v1135 = vlaneseq
        %v1136 = vshrl.u32 %v1135, 7
        %v1137 = vsub.s32 0, %v1136
        %v1138 = vrot.slane %v1018, %v1137
        %v1139 = vlaneseq
        %v1140 = vshrl.u32 %v1139, 7
        %v1141 = vsub.s32 1, %v1140
        %v1142 = vrot.slane %v1018, %v1141
        %v1143 = vlaneseq
        %v1144 = vshrl.u32 %v1143, 7
        %v1145 = vsub.s32 2, %v1144
        %v1146 = vrot.slane %v1018, %v1145
        %v1147 = vlaneseq
        %v1148 = vshrl.u32 %v1147, 7
        %v1149 = vsub.s32 3, %v1148
        %v1150 = vrot.slane %v1018, %v1149
        %v1151 = vlaneseq
        %v1152 = vshrl.u32 %v1151, 7
        %v1153 = vsub.s32 4, %v1152
        %v1154 = vrot.slane %v1018, %v1153
        %v1155 = vlaneseq
        %v1156 = vshrl.u32 %v1155, 7
        %v1157 = vsub.s32 5, %v1156
        %v1158 = vrot.slane %v1018, %v1157
        %v1159 = vlaneseq
        %v1160 = vshrl.u32 %v1159, 7
        %v1161 = vsub.s32 6, %v1160
        %v1162 = vrot.slane %v1018, %v1161
        %v1163 = vlaneseq
        %v1164 = vshrl.u32 %v1163, 7
        %v1165 = vsub.s32 7, %v1164
        %v1166 = vrot.slane %v1018, %v1165
        %v1167 = vlaneseq
        %v1168 = vshrl.u32 %v1167, 7
        %v1169 = vsub.s32 0, %v1168
        %v1170 = vrot.slane %v1021, %v1169
        %v1171 = vlaneseq
        %v1172 = vshrl.u32 %v1171, 7
        %v1173 = vsub.s32 1, %v1172
        %v1174 = vrot.slane %v1021, %v1173
        %v1175 = vlaneseq
        %v1176 = vshrl.u32 %v1175, 7
        %v1177 = vsub.s32 2, %v1176
        %v1178 = vrot.slane %v1021, %v1177
        %v1179 = vlaneseq
        %v1180 = vshrl.u32 %v1179, 7
        %v1181 = vsub.s32 3, %v1180
        %v1182 = vrot.slane %v1021, %v1181
        %v1183 = vlaneseq
        %v1184 = vshrl.u32 %v1183, 7
        %v1185 = vsub.s32 4, %v1184
        %v1186 = vrot.slane %v1021, %v1185
        %v1187 = vlaneseq
        %v1188 = vshrl.u32 %v1187, 7
        %v1189 = vsub.s32 5, %v1188
        %v1190 = vrot.slane %v1021, %v1189
        %v1191 = vlaneseq
        %v1192 = vshrl.u32 %v1191, 7
        %v1193 = vsub.s32 6, %v1192
        %v1194 = vrot.slane %v1021, %v1193
        %v1195 = vlaneseq
        %v1196 = vshrl.u32 %v1195, 7
        %v1197 = vsub.s32 7, %v1196
        %v1198 = vrot.slane %v1021, %v1197
        %v1199 = vlaneseq
        %v1200 = vshrl.u32 %v1199, 7
        %v1201 = vsub.s32 0, %v1200
        %v1202 = vrot.slane %v1024, %v1201
        %v1203 = vlaneseq
        %v1204 = vshrl.u32 %v1203, 7
        %v1205 = vsub.s32 1, %v1204
        %v1206 = vrot.slane %v1024, %v1205
        %v1207 = vlaneseq
        %v1208 = vshrl.u32 %v1207, 7
        %v1209 = vsub.s32 2, %v1208
        %v1210 = vrot.slane %v1024, %v1209
        %v1211 = vlaneseq
        %v1212 = vshrl.u32 %v1211, 7
        %v1213 = vsub.s32 3, %v1212
        %v1214 = vrot.slane %v1024, %v1213
        %v1215 = vlaneseq
        %v1216 = vshrl.u32 %v1215, 7
        %v1217 = vsub.s32 4, %v1216
        %v1218 = vrot.slane %v1024, %v1217
        %v1219 = vlaneseq
        %v1220 = vshrl.u32 %v1219, 7
        %v1221 = vsub.s32 5, %v1220
        %v1222 = vrot.slane %v1024, %v1221
        %v1223 = vlaneseq
        %v1224 = vshrl.u32 %v1223, 7
        %v1225 = vsub.s32 6, %v1224
        %v1226 = vrot.slane %v1024, %v1225
        %v1227 = vlaneseq
        %v1228 = vshrl.u32 %v1227, 7
        %v1229 = vsub.s32 7, %v1228
        %v1230 = vrot.slane %v1024, %v1229
        %v1231 = vlaneseq
        %v1232 = vshrl.u32 %v1231, 7
        %v1233 = vsub.s32 0, %v1232
        %v1234 = vrot.slane %v1027, %v1233
        %v1235 = vlaneseq
        %v1236 = vshrl.u32 %v1235, 7
        %v1237 = vsub.s32 1, %v1236
        %v1238 = vrot.slane %v1027, %v1237
        %v1239 = vlaneseq
        %v1240 = vshrl.u32 %v1239, 7
        %v1241 = vsub.s32 2, %v1240
        %v1242 = vrot.slane %v1027, %v1241
        %v1243 = vlaneseq
        %v1244 = vshrl.u32 %v1243, 7
        %v1245 = vsub.s32 3, %v1244
        %v1246 = vrot.slane %v1027, %v1245
        %v1247 = vlaneseq
        %v1248 = vshrl.u32 %v1247, 7
        %v1249 = vsub.s32 4, %v1248
        %v1250 = vrot.slane %v1027, %v1249
        %v1251 = vlaneseq
        %v1252 = vshrl.u32 %v1251, 7
        %v1253 = vsub.s32 5, %v1252
        %v1254 = vrot.slane %v1027, %v1253
        %v1255 = vlaneseq
        %v1256 = vshrl.u32 %v1255, 7
        %v1257 = vsub.s32 6, %v1256
        %v1258 = vrot.slane %v1027, %v1257
        %v1259 = vlaneseq
        %v1260 = vshrl.u32 %v1259, 7
        %v1261 = vsub.s32 7, %v1260
        %v1262 = vrot.slane %v1027, %v1261
        %v1263 = vlaneseq
        %v1264 = vshrl.u32 %v1263, 7
        %v1265 = vsub.s32 0, %v1264
        %v1266 = vrot.slane %v1030, %v1265
        %v1267 = vlaneseq
        %v1268 = vshrl.u32 %v1267, 7
        %v1269 = vsub.s32 1, %v1268
        %v1270 = vrot.slane %v1030, %v1269
        %v1271 = vlaneseq
        %v1272 = vshrl.u32 %v1271, 7
        %v1273 = vsub.s32 2, %v1272
        %v1274 = vrot.slane %v1030, %v1273
        %v1275 = vlaneseq
        %v1276 = vshrl.u32 %v1275, 7
        %v1277 = vsub.s32 3, %v1276
        %v1278 = vrot.slane %v1030, %v1277
        %v1279 = vlaneseq
        %v1280 = vshrl.u32 %v1279, 7
        %v1281 = vsub.s32 4, %v1280
        %v1282 = vrot.slane %v1030, %v1281
        %v1283 = vlaneseq
        %v1284 = vshrl.u32 %v1283, 7
        %v1285 = vsub.s32 5, %v1284
        %v1286 = vrot.slane %v1030, %v1285
        %v1287 = vlaneseq
        %v1288 = vshrl.u32 %v1287, 7
        %v1289 = vsub.s32 6, %v1288
        %v1290 = vrot.slane %v1030, %v1289
        %v1291 = vlaneseq
        %v1292 = vshrl.u32 %v1291, 7
        %v1293 = vsub.s32 7, %v1292
        %v1294 = vrot.slane %v1030, %v1293
        %v1295 = vcombine.low %v1042, %v1046
        %v1296 = vcombine.low %v1050, %v1054
        %v1297 = vcombine.low %v1058, %v1062
        %v1298 = vcombine.low %v1066, %v1070
        %v1300 = vunpack.c.l.s4 1966171168
        %v1301 = vunpack.c.0.s8 %v1300
        %v1302 = vlaneseq
        %v1303 = vshrl.u32 %v1302, 7
        %v1304 = vsub.s32 %v1301, %v1303
        %v1305 = vrot.slane %v1295, %v1304
        %v1307 = vunpack.c.l.s4 1966171168
        %v1308 = vunpack.c.0.s8 %v1307
        %v1309 = vlaneseq
        %v1310 = vshrl.u32 %v1309, 7
        %v1311 = vsub.s32 %v1308, %v1310
        %v1312 = vrot.slane %v1296, %v1311
        %v1314 = vunpack.c.l.s4 1966171168
        %v1315 = vunpack.c.0.s8 %v1314
        %v1316 = vlaneseq
        %v1317 = vshrl.u32 %v1316, 7
        %v1318 = vsub.s32 %v1315, %v1317
        %v1319 = vrot.slane %v1297, %v1318
        %v1321 = vunpack.c.l.s4 1966171168
        %v1322 = vunpack.c.0.s8 %v1321
        %v1323 = vlaneseq
        %v1324 = vshrl.u32 %v1323, 7
        %v1325 = vsub.s32 %v1322, %v1324
        %v1326 = vrot.slane %v1298, %v1325
        %v1327 = vcombine.low %v1305, %v1312
        %v1328 = vcombine.low %v1319, %v1326
        %v1330 = vunpack.c.l.s4 1966171168
        %v1331 = vunpack.c.0.s8 %v1330
        %v1332 = vlaneseq
        %v1333 = vshrl.u32 %v1332, 7
        %v1334 = vsub.s32 %v1331, %v1333
        %v1335 = vrot.slane %v1327, %v1334
        %v1337 = vunpack.c.l.s4 1966171168
        %v1338 = vunpack.c.0.s8 %v1337
        %v1339 = vlaneseq
        %v1340 = vshrl.u32 %v1339, 7
        %v1341 = vsub.s32 %v1338, %v1340
        %v1342 = vrot.slane %v1328, %v1341
        %v1343 = vcombine.low %v1335, %v1342
        %v1344 = vcombine.low %v1074, %v1078
        %v1345 = vcombine.low %v1082, %v1086
        %v1346 = vcombine.low %v1090, %v1094
        %v1347 = vcombine.low %v1098, %v1102
        %v1349 = vunpack.c.l.s4 1966171168
        %v1350 = vunpack.c.0.s8 %v1349
        %v1351 = vlaneseq
        %v1352 = vshrl.u32 %v1351, 7
        %v1353 = vsub.s32 %v1350, %v1352
        %v1354 = vrot.slane %v1344, %v1353
        %v1356 = vunpack.c.l.s4 1966171168
        %v1357 = vunpack.c.0.s8 %v1356
        %v1358 = vlaneseq
        %v1359 = vshrl.u32 %v1358, 7
        %v1360 = vsub.s32 %v1357, %v1359
        %v1361 = vrot.slane %v1345, %v1360
        %v1363 = vunpack.c.l.s4 1966171168
        %v1364 = vunpack.c.0.s8 %v1363
        %v1365 = vlaneseq
        %v1366 = vshrl.u32 %v1365, 7
        %v1367 = vsub.s32 %v1364, %v1366
        %v1368 = vrot.slane %v1346, %v1367
        %v1370 = vunpack.c.l.s4 1966171168
        %v1371 = vunpack.c.0.s8 %v1370
        %v1372 = vlaneseq
        %v1373 = vshrl.u32 %v1372, 7
        %v1374 = vsub.s32 %v1371, %v1373
        %v1375 = vrot.slane %v1347, %v1374
        %v1376 = vcombine.low %v1354, %v1361
        %v1377 = vcombine.low %v1368, %v1375
        %v1379 = vunpack.c.l.s4 1966171168
        %v1380 = vunpack.c.0.s8 %v1379
        %v1381 = vlaneseq
        %v1382 = vshrl.u32 %v1381, 7
        %v1383 = vsub.s32 %v1380, %v1382
        %v1384 = vrot.slane %v1376, %v1383
        %v1386 = vunpack.c.l.s4 1966171168
        %v1387 = vunpack.c.0.s8 %v1386
        %v1388 = vlaneseq
        %v1389 = vshrl.u32 %v1388, 7
        %v1390 = vsub.s32 %v1387, %v1389
        %v1391 = vrot.slane %v1377, %v1390
        %v1392 = vcombine.low %v1384, %v1391
        %v1393 = vcombine.low %v1106, %v1110
        %v1394 = vcombine.low %v1114, %v1118
        %v1395 = vcombine.low %v1122, %v1126
        %v1396 = vcombine.low %v1130, %v1134
        %v1398 = vunpack.c.l.s4 1966171168
        %v1399 = vunpack.c.0.s8 %v1398
        %v1400 = vlaneseq
        %v1401 = vshrl.u32 %v1400, 7
        %v1402 = vsub.s32 %v1399, %v1401
        %v1403 = vrot.slane %v1393, %v1402
        %v1405 = vunpack.c.l.s4 1966171168
        %v1406 = vunpack.c.0.s8 %v1405
        %v1407 = vlaneseq
        %v1408 = vshrl.u32 %v1407, 7
        %v1409 = vsub.s32 %v1406, %v1408
        %v1410 = vrot.slane %v1394, %v1409
        %v1412 = vunpack.c.l.s4 1966171168
        %v1413 = vunpack.c.0.s8 %v1412
        %v1414 = vlaneseq
        %v1415 = vshrl.u32 %v1414, 7
        %v1416 = vsub.s32 %v1413, %v1415
        %v1417 = vrot.slane %v1395, %v1416
        %v1419 = vunpack.c.l.s4 1966171168
        %v1420 = vunpack.c.0.s8 %v1419
        %v1421 = vlaneseq
        %v1422 = vshrl.u32 %v1421, 7
        %v1423 = vsub.s32 %v1420, %v1422
        %v1424 = vrot.slane %v1396, %v1423
        %v1425 = vcombine.low %v1403, %v1410
        %v1426 = vcombine.low %v1417, %v1424
        %v1428 = vunpack.c.l.s4 1966171168
        %v1429 = vunpack.c.0.s8 %v1428
        %v1430 = vlaneseq
        %v1431 = vshrl.u32 %v1430, 7
        %v1432 = vsub.s32 %v1429, %v1431
        %v1433 = vrot.slane %v1425, %v1432
        %v1435 = vunpack.c.l.s4 1966171168
        %v1436 = vunpack.c.0.s8 %v1435
        %v1437 = vlaneseq
        %v1438 = vshrl.u32 %v1437, 7
        %v1439 = vsub.s32 %v1436, %v1438
        %v1440 = vrot.slane %v1426, %v1439
        %v1441 = vcombine.low %v1433, %v1440
        %v1442 = vcombine.low %v1138, %v1142
        %v1443 = vcombine.low %v1146, %v1150
        %v1444 = vcombine.low %v1154, %v1158
        %v1445 = vcombine.low %v1162, %v1166
        %v1447 = vunpack.c.l.s4 1966171168
        %v1448 = vunpack.c.0.s8 %v1447
        %v1449 = vlaneseq
        %v1450 = vshrl.u32 %v1449, 7
        %v1451 = vsub.s32 %v1448, %v1450
        %v1452 = vrot.slane %v1442, %v1451
        %v1454 = vunpack.c.l.s4 1966171168
        %v1455 = vunpack.c.0.s8 %v1454
        %v1456 = vlaneseq
        %v1457 = vshrl.u32 %v1456, 7
        %v1458 = vsub.s32 %v1455, %v1457
        %v1459 = vrot.slane %v1443, %v1458
        %v1461 = vunpack.c.l.s4 1966171168
        %v1462 = vunpack.c.0.s8 %v1461
        %v1463 = vlaneseq
        %v1464 = vshrl.u32 %v1463, 7
        %v1465 = vsub.s32 %v1462, %v1464
        %v1466 = vrot.slane %v1444, %v1465
        %v1468 = vunpack.c.l.s4 1966171168
        %v1469 = vunpack.c.0.s8 %v1468
        %v1470 = vlaneseq
        %v1471 = vshrl.u32 %v1470, 7
        %v1472 = vsub.s32 %v1469, %v1471
        %v1473 = vrot.slane %v1445, %v1472
        %v1474 = vcombine.low %v1452, %v1459
        %v1475 = vcombine.low %v1466, %v1473
        %v1477 = vunpack.c.l.s4 1966171168
        %v1478 = vunpack.c.0.s8 %v1477
        %v1479 = vlaneseq
        %v1480 = vshrl.u32 %v1479, 7
        %v1481 = vsub.s32 %v1478, %v1480
        %v1482 = vrot.slane %v1474, %v1481
        %v1484 = vunpack.c.l.s4 1966171168
        %v1485 = vunpack.c.0.s8 %v1484
        %v1486 = vlaneseq
        %v1487 = vshrl.u32 %v1486, 7
        %v1488 = vsub.s32 %v1485, %v1487
        %v1489 = vrot.slane %v1475, %v1488
        %v1490 = vcombine.low %v1482, %v1489
        %v1491 = vcombine.low %v1170, %v1174
        %v1492 = vcombine.low %v1178, %v1182
        %v1493 = vcombine.low %v1186, %v1190
        %v1494 = vcombine.low %v1194, %v1198
        %v1496 = vunpack.c.l.s4 1966171168
        %v1497 = vunpack.c.0.s8 %v1496
        %v1498 = vlaneseq
        %v1499 = vshrl.u32 %v1498, 7
        %v1500 = vsub.s32 %v1497, %v1499
        %v1501 = vrot.slane %v1491, %v1500
        %v1503 = vunpack.c.l.s4 1966171168
        %v1504 = vunpack.c.0.s8 %v1503
        %v1505 = vlaneseq
        %v1506 = vshrl.u32 %v1505, 7
        %v1507 = vsub.s32 %v1504, %v1506
        %v1508 = vrot.slane %v1492, %v1507
        %v1510 = vunpack.c.l.s4 1966171168
        %v1511 = vunpack.c.0.s8 %v1510
        %v1512 = vlaneseq
        %v1513 = vshrl.u32 %v1512, 7
        %v1514 = vsub.s32 %v1511, %v1513
        %v1515 = vrot.slane %v1493, %v1514
        %v1517 = vunpack.c.l.s4 1966171168
        %v1518 = vunpack.c.0.s8 %v1517
        %v1519 = vlaneseq
        %v1520 = vshrl.u32 %v1519, 7
        %v1521 = vsub.s32 %v1518, %v1520
        %v1522 = vrot.slane %v1494, %v1521
        %v1523 = vcombine.low %v1501, %v1508
        %v1524 = vcombine.low %v1515, %v1522
        %v1526 = vunpack.c.l.s4 1966171168
        %v1527 = vunpack.c.0.s8 %v1526
        %v1528 = vlaneseq
        %v1529 = vshrl.u32 %v1528, 7
        %v1530 = vsub.s32 %v1527, %v1529
        %v1531 = vrot.slane %v1523, %v1530
        %v1533 = vunpack.c.l.s4 1966171168
        %v1534 = vunpack.c.0.s8 %v1533
        %v1535 = vlaneseq
        %v1536 = vshrl.u32 %v1535, 7
        %v1537 = vsub.s32 %v1534, %v1536
        %v1538 = vrot.slane %v1524, %v1537
        %v1539 = vcombine.low %v1531, %v1538
        %v1540 = vcombine.low %v1202, %v1206
        %v1541 = vcombine.low %v1210, %v1214
        %v1542 = vcombine.low %v1218, %v1222
        %v1543 = vcombine.low %v1226, %v1230
        %v1545 = vunpack.c.l.s4 1966171168
        %v1546 = vunpack.c.0.s8 %v1545
        %v1547 = vlaneseq
        %v1548 = vshrl.u32 %v1547, 7
        %v1549 = vsub.s32 %v1546, %v1548
        %v1550 = vrot.slane %v1540, %v1549
        %v1552 = vunpack.c.l.s4 1966171168
        %v1553 = vunpack.c.0.s8 %v1552
        %v1554 = vlaneseq
        %v1555 = vshrl.u32 %v1554, 7
        %v1556 = vsub.s32 %v1553, %v1555
        %v1557 = vrot.slane %v1541, %v1556
        %v1559 = vunpack.c.l.s4 1966171168
        %v1560 = vunpack.c.0.s8 %v1559
        %v1561 = vlaneseq
        %v1562 = vshrl.u32 %v1561, 7
        %v1563 = vsub.s32 %v1560, %v1562
        %v1564 = vrot.slane %v1542, %v1563
        %v1566 = vunpack.c.l.s4 1966171168
        %v1567 = vunpack.c.0.s8 %v1566
        %v1568 = vlaneseq
        %v1569 = vshrl.u32 %v1568, 7
        %v1570 = vsub.s32 %v1567, %v1569
        %v1571 = vrot.slane %v1543, %v1570
        %v1572 = vcombine.low %v1550, %v1557
        %v1573 = vcombine.low %v1564, %v1571
        %v1575 = vunpack.c.l.s4 1966171168
        %v1576 = vunpack.c.0.s8 %v1575
        %v1577 = vlaneseq
        %v1578 = vshrl.u32 %v1577, 7
        %v1579 = vsub.s32 %v1576, %v1578
        %v1580 = vrot.slane %v1572, %v1579
        %v1582 = vunpack.c.l.s4 1966171168
        %v1583 = vunpack.c.0.s8 %v1582
        %v1584 = vlaneseq
        %v1585 = vshrl.u32 %v1584, 7
        %v1586 = vsub.s32 %v1583, %v1585
        %v1587 = vrot.slane %v1573, %v1586
        %v1588 = vcombine.low %v1580, %v1587
        %v1589 = vcombine.low %v1234, %v1238
        %v1590 = vcombine.low %v1242, %v1246
        %v1591 = vcombine.low %v1250, %v1254
        %v1592 = vcombine.low %v1258, %v1262
        %v1594 = vunpack.c.l.s4 1966171168
        %v1595 = vunpack.c.0.s8 %v1594
        %v1596 = vlaneseq
        %v1597 = vshrl.u32 %v1596, 7
        %v1598 = vsub.s32 %v1595, %v1597
        %v1599 = vrot.slane %v1589, %v1598
        %v1601 = vunpack.c.l.s4 1966171168
        %v1602 = vunpack.c.0.s8 %v1601
        %v1603 = vlaneseq
        %v1604 = vshrl.u32 %v1603, 7
        %v1605 = vsub.s32 %v1602, %v1604
        %v1606 = vrot.slane %v1590, %v1605
        %v1608 = vunpack.c.l.s4 1966171168
        %v1609 = vunpack.c.0.s8 %v1608
        %v1610 = vlaneseq
        %v1611 = vshrl.u32 %v1610, 7
        %v1612 = vsub.s32 %v1609, %v1611
        %v1613 = vrot.slane %v1591, %v1612
        %v1615 = vunpack.c.l.s4 1966171168
        %v1616 = vunpack.c.0.s8 %v1615
        %v1617 = vlaneseq
        %v1618 = vshrl.u32 %v1617, 7
        %v1619 = vsub.s32 %v1616, %v1618
        %v1620 = vrot.slane %v1592, %v1619
        %v1621 = vcombine.low %v1599, %v1606
        %v1622 = vcombine.low %v1613, %v1620
        %v1624 = vunpack.c.l.s4 1966171168
        %v1625 = vunpack.c.0.s8 %v1624
        %v1626 = vlaneseq
        %v1627 = vshrl.u32 %v1626, 7
        %v1628 = vsub.s32 %v1625, %v1627
        %v1629 = vrot.slane %v1621, %v1628
        %v1631 = vunpack.c.l.s4 1966171168
        %v1632 = vunpack.c.0.s8 %v1631
        %v1633 = vlaneseq
        %v1634 = vshrl.u32 %v1633, 7
        %v1635 = vsub.s32 %v1632, %v1634
        %v1636 = vrot.slane %v1622, %v1635
        %v1637 = vcombine.low %v1629, %v1636
        %v1638 = vcombine.low %v1266, %v1270
        %v1639 = vcombine.low %v1274, %v1278
        %v1640 = vcombine.low %v1282, %v1286
        %v1641 = vcombine.low %v1290, %v1294
        %v1643 = vunpack.c.l.s4 1966171168
        %v1644 = vunpack.c.0.s8 %v1643
        %v1645 = vlaneseq
        %v1646 = vshrl.u32 %v1645, 7
        %v1647 = vsub.s32 %v1644, %v1646
        %v1648 = vrot.slane %v1638, %v1647
        %v1650 = vunpack.c.l.s4 1966171168
        %v1651 = vunpack.c.0.s8 %v1650
        %v1652 = vlaneseq
        %v1653 = vshrl.u32 %v1652, 7
        %v1654 = vsub.s32 %v1651, %v1653
        %v1655 = vrot.slane %v1639, %v1654
        %v1657 = vunpack.c.l.s4 1966171168
        %v1658 = vunpack.c.0.s8 %v1657
        %v1659 = vlaneseq
        %v1660 = vshrl.u32 %v1659, 7
        %v1661 = vsub.s32 %v1658, %v1660
        %v1662 = vrot.slane %v1640, %v1661
        %v1664 = vunpack.c.l.s4 1966171168
        %v1665 = vunpack.c.0.s8 %v1664
        %v1666 = vlaneseq
        %v1667 = vshrl.u32 %v1666, 7
        %v1668 = vsub.s32 %v1665, %v1667
        %v1669 = vrot.slane %v1641, %v1668
        %v1670 = vcombine.low %v1648, %v1655
        %v1671 = vcombine.low %v1662, %v1669
        %v1673 = vunpack.c.l.s4 1966171168
        %v1674 = vunpack.c.0.s8 %v1673
        %v1675 = vlaneseq
        %v1676 = vshrl.u32 %v1675, 7
        %v1677 = vsub.s32 %v1674, %v1676
        %v1678 = vrot.slane %v1670, %v1677
        %v1680 = vunpack.c.l.s4 1966171168
        %v1681 = vunpack.c.0.s8 %v1680
        %v1682 = vlaneseq
        %v1683 = vshrl.u32 %v1682, 7
        %v1684 = vsub.s32 %v1681, %v1683
        %v1685 = vrot.slane %v1671, %v1684
        %v1686 = vcombine.low %v1678, %v1685
        %1687 = vset.pattern.permute.xlu0 0
        %1688 = vperm.xlu0 %1687, %v1343
        %v1689 = vpop.permute.xlu0 %1688
        %1690 = vset.pattern.permute.xlu0 0
        %1691 = vperm.xlu0 %1690, %v1392
        %v1692 = vpop.permute.xlu0 %1691
        %1693 = vset.pattern.permute.xlu0 0
        %1694 = vperm.xlu0 %1693, %v1441
        %v1695 = vpop.permute.xlu0 %1694
        %1696 = vset.pattern.permute.xlu0 0
        %1697 = vperm.xlu0 %1696, %v1490
        %v1698 = vpop.permute.xlu0 %1697
        %1699 = vset.pattern.permute.xlu0 0
        %1700 = vperm.xlu0 %1699, %v1539
        %v1701 = vpop.permute.xlu0 %1700
        %1702 = vset.pattern.permute.xlu0 0
        %1703 = vperm.xlu0 %1702, %v1588
        %v1704 = vpop.permute.xlu0 %1703
        %1705 = vset.pattern.permute.xlu0 0
        %1706 = vperm.xlu0 %1705, %v1637
        %v1707 = vpop.permute.xlu0 %1706
        %1708 = vset.pattern.permute.xlu0 0
        %1709 = vperm.xlu0 %1708, %v1686
        %v1710 = vpop.permute.xlu0 %1709
        %v1711 = vlaneseq
        %v1712 = vshrl.u32 %v1711, 7
        %v1713 = vsub.s32 %v934, %v1712
        %v1714 = vrot.slane %v1689, %v1713
        %v1715 = vlaneseq
        %v1716 = vshrl.u32 %v1715, 7
        %v1717 = vsub.s32 %v939, %v1716
        %v1718 = vrot.slane %v1692, %v1717
        %v1719 = vsel %vm944, %v1718, %v1714
        %v1720 = vlaneseq
        %v1721 = vshrl.u32 %v1720, 7
        %v1722 = vsub.s32 %v946, %v1721
        %v1723 = vrot.slane %v1695, %v1722
        %v1724 = vsel %vm951, %v1723, %v1719
        %v1725 = vlaneseq
        %v1726 = vshrl.u32 %v1725, 7
        %v1727 = vsub.s32 %v953, %v1726
        %v1728 = vrot.slane %v1698, %v1727
        %v1729 = vsel %vm958, %v1728, %v1724
        %v1730 = vlaneseq
        %v1731 = vshrl.u32 %v1730, 7
        %v1732 = vsub.s32 %v960, %v1731
        %v1733 = vrot.slane %v1701, %v1732
        %v1734 = vsel %vm965, %v1733, %v1729
        %v1735 = vlaneseq
        %v1736 = vshrl.u32 %v1735, 7
        %v1737 = vsub.s32 %v967, %v1736
        %v1738 = vrot.slane %v1704, %v1737
        %v1739 = vsel %vm972, %v1738, %v1734
        %v1740 = vlaneseq
        %v1741 = vshrl.u32 %v1740, 7
        %v1742 = vsub.s32 %v974, %v1741
        %v1743 = vrot.slane %v1707, %v1742
        %v1744 = vsel %vm979, %v1743, %v1739
        %v1745 = vlaneseq
        %v1746 = vshrl.u32 %v1745, 7
        %v1747 = vsub.s32 %v981, %v1746
        %v1748 = vrot.slane %v1710, %v1747
        %v1749 = vsel %vm986, %v1748, %v1744
        %v1751 = vunpack.c.l.s4 1966171168
        %v1752 = vunpack.c.0.s8 %v1751
        %v1753 = vlaneseq
        %v1754 = vshrl.u32 %v1753, 7
        %v1755 = vsub.s32 %v1752, %v1754
        %v1756 = vrot.slane %v1749, %v1755
        %v1758 = vunpack.c.l.s4 1966171168
        %v1759 = vunpack.c.0.s8 %v1758
        %v1760 = vlaneseq
        %v1761 = vshrl.u32 %v1760, 7
        %v1762 = vsub.s32 %v1759, %v1761
        %v1763 = vrot.slane %v1756, %v1762
        %v1765 = vmax.f32 %v1006, %v1763
        %1766 = vst.msk [vmem:[#allocation3] sm:$0x1] %vm1004, %v1765
        // Predicated region
        $region41: #{tpu_custom_call.1} parent=31 // pred_check
          %p1767 = pneg %p205
        $region42: #{tpu_custom_call.1} parent=31 // pred_check_branch
          %1769 = sbr.rel (%p1767) target = $region44
        $region43: #{tpu_custom_call.1} parent=31 // pred_region
          %v1770 = vld [vmem:[#allocation2] sm:$0x1]
          %v1771 = vmul.f32 %v1770, 0.00390625
          %v1772 = vld [vmem:[#allocation3] sm:$0x1]
          %v1773 = vld [vmem:[%s1] sm:$0xff]
          %v1774 = vld [vmem:[%s1 + $0x8] sm:$0xff]
          %v1775 = vld [vmem:[%s1 + $0x10] sm:$0xff]
          %v1776 = vld [vmem:[%s1 + $0x18] sm:$0xff]
          %v1777 = vld [vmem:[%s1 + $0x20] sm:$0xff]
          %v1778 = vld [vmem:[%s1 + $0x28] sm:$0xff]
          %v1779 = vld [vmem:[%s1 + $0x30] sm:$0xff]
          %v1780 = vld [vmem:[%s1 + $0x38] sm:$0xff]
          %vm1781 = vcmask 523264
          %v1783 = vsel %vm1781, %v1771, 0
          %1785 = vmatprep.subr.mxu0 0.0
          %1786 = vmatpush1.msra.mxu0 0.0
          %1787 = vmatprep.subr.mxu0 0.0
          %1788 = vmatpush1.msra.mxu0 0.0
          %1789 = vmatprep.subr.mxu0 0.0
          %1790 = vmatpush1.msra.mxu0 0.0
          %1791 = vmatprep.subr.mxu0 0.0
          %1792 = vmatpush1.msra.mxu0 0.0
          %1793 = vmatprep.subr.mxu0 0.0
          %1794 = vmatpush1.msra.mxu0 0.0
          %1795 = vmatprep.subr.mxu0 0.0
          %1796 = vmatpush1.msra.mxu0 0.0
          %1797 = vmatprep.subr.mxu0 0.0
          %1798 = vmatpush1.msra.mxu0 0.0
          %1799 = vmatprep.subr.mxu0 0.0
          %1800 = vmatpush1.msra.mxu0 0.0
          %1801 = vmatprep.subr.mxu0 0.0
          %1802 = vmatpush1.msra.mxu0 %v1780
          %1803 = vmatprep.subr.mxu0 0.0
          %1804 = vmatpush1.msra.mxu0 %v1779
          %1805 = vmatprep.subr.mxu0 0.0
          %1806 = vmatpush1.msra.mxu0 %v1778
          %1807 = vmatprep.subr.mxu0 0.0
          %1808 = vmatpush1.msra.mxu0 %v1777
          %1809 = vmatprep.subr.mxu0 0.0
          %1810 = vmatpush1.msra.mxu0 %v1776
          %1811 = vmatprep.subr.mxu0 0.0
          %1812 = vmatpush1.msra.mxu0 %v1775
          %1813 = vmatprep.subr.mxu0 0.0
          %1814 = vmatpush1.msra.mxu0 %v1774
          %1815 = vmatprep.subr.mxu0 0.0
          %1816 = vmatpush1.msra.mxu0 %v1773
          %1817 = vmatprep.subr.mxu0 0.0
          %1818 = vmatpush2.msra.mxu0 0.0
          %1819 = vmatprep.subr.mxu0 0.0
          %1820 = vmatpush2.msra.mxu0 0.0
          %1821 = vmatprep.subr.mxu0 0.0
          %1822 = vmatpush2.msra.mxu0 0.0
          %1823 = vmatprep.subr.mxu0 0.0
          %1824 = vmatpush2.msra.mxu0 0.0
          %1825 = vmatprep.subr.mxu0 0.0
          %1826 = vmatpush2.msra.mxu0 0.0
          %1827 = vmatprep.subr.mxu0 0.0
          %1828 = vmatpush2.msra.mxu0 0.0
          %1829 = vmatprep.subr.mxu0 0.0
          %1830 = vmatpush2.msra.mxu0 0.0
          %1831 = vmatprep.subr.mxu0 0.0
          %1832 = vmatpush2.msra.mxu0 0.0
          %1833 = vmatprep.subr.mxu0 0.0
          %1834 = vmatpush2.msra.mxu0 0.0
          %1835 = vmatprep.subr.mxu0 0.0
          %1836 = vmatpush2.msra.mxu0 0.0
          %1837 = vmatprep.subr.mxu0 0.0
          %1838 = vmatpush2.msra.mxu0 0.0
          %1839 = vmatprep.subr.mxu0 0.0
          %1840 = vmatpush2.msra.mxu0 0.0
          %1841 = vmatprep.subr.mxu0 0.0
          %1842 = vmatpush2.msra.mxu0 0.0
          %1843 = vmatprep.subr.mxu0 0.0
          %1844 = vmatpush2.msra.mxu0 0.0
          %1845 = vmatprep.subr.mxu0 0.0
          %1846 = vmatpush2.msra.mxu0 0.0
          %1847 = vmatprep.subr.mxu0 0.0
          %1848 = vmatpush2.msra.mxu0 0.0
          %1849 = vmatprep.mubr.f32.mxu0 0.0
          %1850 = vmatmul.mubr.f32.gmra.mxu0 %v1783
          %v1851 = vpop.f32.mrf.mxu0
          %v1852 = vadd.f32 0.0, %v1851
          %v1853 = vpop.f32.mrf.mxu0
          %1854 = vdwg.mxu0
          %v1855 = vmax.f32 %v1852, 0.0
          %v1856 = vld [vmem:[%s2] sm:$0xf]
          %v1858 = vsel %vm1781, %v1772, 0
          %1860 = vmatprep.subr.mxu0 0.0
          %1861 = vmatpush1.msra.mxu0 0.0
          %1862 = vmatprep.subr.mxu0 0.0
          %1863 = vmatpush1.msra.mxu0 0.0
          %1864 = vmatprep.subr.mxu0 0.0
          %1865 = vmatpush1.msra.mxu0 0.0
          %1866 = vmatprep.subr.mxu0 0.0
          %1867 = vmatpush1.msra.mxu0 0.0
          %1868 = vmatprep.subr.mxu0 0.0
          %1869 = vmatpush1.msra.mxu0 0.0
          %1870 = vmatprep.subr.mxu0 0.0
          %1871 = vmatpush1.msra.mxu0 0.0
          %1872 = vmatprep.subr.mxu0 0.0
          %1873 = vmatpush1.msra.mxu0 0.0
          %1874 = vmatprep.subr.mxu0 0.0
          %1875 = vmatpush1.msra.mxu0 0.0
          %1876 = vmatprep.subr.mxu0 0.0
          %1877 = vmatpush1.msra.mxu0 %v1780
          %1878 = vmatprep.subr.mxu0 0.0
          %1879 = vmatpush1.msra.mxu0 %v1779
          %1880 = vmatprep.subr.mxu0 0.0
          %1881 = vmatpush1.msra.mxu0 %v1778
          %1882 = vmatprep.subr.mxu0 0.0
          %1883 = vmatpush1.msra.mxu0 %v1777
          %1884 = vmatprep.subr.mxu0 0.0
          %1885 = vmatpush1.msra.mxu0 %v1776
          %1886 = vmatprep.subr.mxu0 0.0
          %1887 = vmatpush1.msra.mxu0 %v1775
          %1888 = vmatprep.subr.mxu0 0.0
          %1889 = vmatpush1.msra.mxu0 %v1774
          %1890 = vmatprep.subr.mxu0 0.0
          %1891 = vmatpush1.msra.mxu0 %v1773
          %1892 = vmatprep.subr.mxu0 0.0
          %1893 = vmatpush2.msra.mxu0 0.0
          %1894 = vmatprep.subr.mxu0 0.0
          %1895 = vmatpush2.msra.mxu0 0.0
          %1896 = vmatprep.subr.mxu0 0.0
          %1897 = vmatpush2.msra.mxu0 0.0
          %1898 = vmatprep.subr.mxu0 0.0
          %1899 = vmatpush2.msra.mxu0 0.0
          %1900 = vmatprep.subr.mxu0 0.0
          %1901 = vmatpush2.msra.mxu0 0.0
          %1902 = vmatprep.subr.mxu0 0.0
          %1903 = vmatpush2.msra.mxu0 0.0
          %1904 = vmatprep.subr.mxu0 0.0
          %1905 = vmatpush2.msra.mxu0 0.0
          %1906 = vmatprep.subr.mxu0 0.0
          %1907 = vmatpush2.msra.mxu0 0.0
          %1908 = vmatprep.subr.mxu0 0.0
          %1909 = vmatpush2.msra.mxu0 0.0
          %1910 = vmatprep.subr.mxu0 0.0
          %1911 = vmatpush2.msra.mxu0 0.0
          %1912 = vmatprep.subr.mxu0 0.0
          %1913 = vmatpush2.msra.mxu0 0.0
          %1914 = vmatprep.subr.mxu0 0.0
          %1915 = vmatpush2.msra.mxu0 0.0
          %1916 = vmatprep.subr.mxu0 0.0
          %1917 = vmatpush2.msra.mxu0 0.0
          %1918 = vmatprep.subr.mxu0 0.0
          %1919 = vmatpush2.msra.mxu0 0.0
          %1920 = vmatprep.subr.mxu0 0.0
          %1921 = vmatpush2.msra.mxu0 0.0
          %1922 = vmatprep.subr.mxu0 0.0
          %1923 = vmatpush2.msra.mxu0 0.0
          %1924 = vmatprep.mubr.f32.mxu0 0.0
          %1925 = vmatmul.mubr.f32.gmra.mxu0 %v1858
          %v1926 = vpop.f32.mrf.mxu0
          %v1927 = vadd.f32 0.0, %v1926
          %v1928 = vpop.f32.mrf.mxu0
          %1929 = vdwg.mxu0
          %v1930 = vmax.f32 %v1927, 0.0
          %vm1931 = vcmask 31744
          %v1933 = vsel %vm1931, %v1930, 0
          %vm1935 = vcmask 1043456
          %v1937 = vsel %vm1935, %v1856, 0
          %1939 = vmatprep.subr.mxu0 0.0
          %1940 = vmatpush1.msra.mxu0 0.0
          %1941 = vmatprep.subr.mxu0 0.0
          %1942 = vmatpush1.msra.mxu0 0.0
          %1943 = vmatprep.subr.mxu0 0.0
          %1944 = vmatpush1.msra.mxu0 0.0
          %1945 = vmatprep.subr.mxu0 0.0
          %1946 = vmatpush1.msra.mxu0 0.0
          %1947 = vmatprep.subr.mxu0 0.0
          %1948 = vmatpush1.msra.mxu0 0.0
          %1949 = vmatprep.subr.mxu0 0.0
          %1950 = vmatpush1.msra.mxu0 0.0
          %1951 = vmatprep.subr.mxu0 0.0
          %1952 = vmatpush1.msra.mxu0 0.0
          %1953 = vmatprep.subr.mxu0 0.0
          %1954 = vmatpush1.msra.mxu0 0.0
          %1955 = vmatprep.subr.mxu0 0.0
          %1956 = vmatpush1.msra.mxu0 0.0
          %1957 = vmatprep.subr.mxu0 0.0
          %1958 = vmatpush1.msra.mxu0 0.0
          %1959 = vmatprep.subr.mxu0 0.0
          %1960 = vmatpush1.msra.mxu0 0.0
          %1961 = vmatprep.subr.mxu0 0.0
          %1962 = vmatpush1.msra.mxu0 0.0
          %1963 = vmatprep.subr.mxu0 0.0
          %1964 = vmatpush1.msra.mxu0 0.0
          %1965 = vmatprep.subr.mxu0 0.0
          %1966 = vmatpush1.msra.mxu0 0.0
          %1967 = vmatprep.subr.mxu0 0.0
          %1968 = vmatpush1.msra.mxu0 0.0
          %1969 = vmatprep.subr.mxu0 0.0
          %1970 = vmatpush1.msra.mxu0 %v1937
          %1971 = vmatprep.subr.mxu0 0.0
          %1972 = vmatpush2.msra.mxu0 0.0
          %1973 = vmatprep.subr.mxu0 0.0
          %1974 = vmatpush2.msra.mxu0 0.0
          %1975 = vmatprep.subr.mxu0 0.0
          %1976 = vmatpush2.msra.mxu0 0.0
          %1977 = vmatprep.subr.mxu0 0.0
          %1978 = vmatpush2.msra.mxu0 0.0
          %1979 = vmatprep.subr.mxu0 0.0
          %1980 = vmatpush2.msra.mxu0 0.0
          %1981 = vmatprep.subr.mxu0 0.0
          %1982 = vmatpush2.msra.mxu0 0.0
          %1983 = vmatprep.subr.mxu0 0.0
          %1984 = vmatpush2.msra.mxu0 0.0
          %1985 = vmatprep.subr.mxu0 0.0
          %1986 = vmatpush2.msra.mxu0 0.0
          %1987 = vmatprep.subr.mxu0 0.0
          %1988 = vmatpush2.msra.mxu0 0.0
          %1989 = vmatprep.subr.mxu0 0.0
          %1990 = vmatpush2.msra.mxu0 0.0
          %1991 = vmatprep.subr.mxu0 0.0
          %1992 = vmatpush2.msra.mxu0 0.0
          %1993 = vmatprep.subr.mxu0 0.0
          %1994 = vmatpush2.msra.mxu0 0.0
          %1995 = vmatprep.subr.mxu0 0.0
          %1996 = vmatpush2.msra.mxu0 0.0
          %1997 = vmatprep.subr.mxu0 0.0
          %1998 = vmatpush2.msra.mxu0 0.0
          %1999 = vmatprep.subr.mxu0 0.0
          %2000 = vmatpush2.msra.mxu0 0.0
          %2001 = vmatprep.subr.mxu0 0.0
          %2002 = vmatpush2.msra.mxu0 0.0
          %2003 = vmatprep.mubr.f32.mxu0 0.0
          %2004 = vmatmul.mubr.f32.gmra.mxu0 %v1933
          %v2005 = vpop.f32.mrf.mxu0
          %v2006 = vadd.f32 0.0, %v2005
          %v2007 = vpop.f32.mrf.mxu0
          %2008 = vdwg.mxu0
          %v2010 = vsel %vm1931, %v1855, 0
          %2012 = vmatprep.subr.mxu0 0.0
          %2013 = vmatpush1.msra.mxu0 0.0
          %2014 = vmatprep.subr.mxu0 0.0
          %2015 = vmatpush1.msra.mxu0 0.0
          %2016 = vmatprep.subr.mxu0 0.0
          %2017 = vmatpush1.msra.mxu0 0.0
          %2018 = vmatprep.subr.mxu0 0.0
          %2019 = vmatpush1.msra.mxu0 0.0
          %2020 = vmatprep.subr.mxu0 0.0
          %2021 = vmatpush1.msra.mxu0 0.0
          %2022 = vmatprep.subr.mxu0 0.0
          %2023 = vmatpush1.msra.mxu0 0.0
          %2024 = vmatprep.subr.mxu0 0.0
          %2025 = vmatpush1.msra.mxu0 0.0
          %2026 = vmatprep.subr.mxu0 0.0
          %2027 = vmatpush1.msra.mxu0 0.0
          %2028 = vmatprep.subr.mxu0 0.0
          %2029 = vmatpush1.msra.mxu0 0.0
          %2030 = vmatprep.subr.mxu0 0.0
          %2031 = vmatpush1.msra.mxu0 0.0
          %2032 = vmatprep.subr.mxu0 0.0
          %2033 = vmatpush1.msra.mxu0 0.0
          %2034 = vmatprep.subr.mxu0 0.0
          %2035 = vmatpush1.msra.mxu0 0.0
          %2036 = vmatprep.subr.mxu0 0.0
          %2037 = vmatpush1.msra.mxu0 0.0
          %2038 = vmatprep.subr.mxu0 0.0
          %2039 = vmatpush1.msra.mxu0 0.0
          %2040 = vmatprep.subr.mxu0 0.0
          %2041 = vmatpush1.msra.mxu0 0.0
          %2042 = vmatprep.subr.mxu0 0.0
          %2043 = vmatpush1.msra.mxu0 %v1937
          %2044 = vmatprep.subr.mxu0 0.0
          %2045 = vmatpush2.msra.mxu0 0.0
          %2046 = vmatprep.subr.mxu0 0.0
          %2047 = vmatpush2.msra.mxu0 0.0
          %2048 = vmatprep.subr.mxu0 0.0
          %2049 = vmatpush2.msra.mxu0 0.0
          %2050 = vmatprep.subr.mxu0 0.0
          %2051 = vmatpush2.msra.mxu0 0.0
          %2052 = vmatprep.subr.mxu0 0.0
          %2053 = vmatpush2.msra.mxu0 0.0
          %2054 = vmatprep.subr.mxu0 0.0
          %2055 = vmatpush2.msra.mxu0 0.0
          %2056 = vmatprep.subr.mxu0 0.0
          %2057 = vmatpush2.msra.mxu0 0.0
          %2058 = vmatprep.subr.mxu0 0.0
          %2059 = vmatpush2.msra.mxu0 0.0
          %2060 = vmatprep.subr.mxu0 0.0
          %2061 = vmatpush2.msra.mxu0 0.0
          %2062 = vmatprep.subr.mxu0 0.0
          %2063 = vmatpush2.msra.mxu0 0.0
          %2064 = vmatprep.subr.mxu0 0.0
          %2065 = vmatpush2.msra.mxu0 0.0
          %2066 = vmatprep.subr.mxu0 0.0
          %2067 = vmatpush2.msra.mxu0 0.0
          %2068 = vmatprep.subr.mxu0 0.0
          %2069 = vmatpush2.msra.mxu0 0.0
          %2070 = vmatprep.subr.mxu0 0.0
          %2071 = vmatpush2.msra.mxu0 0.0
          %2072 = vmatprep.subr.mxu0 0.0
          %2073 = vmatpush2.msra.mxu0 0.0
          %2074 = vmatprep.subr.mxu0 0.0
          %2075 = vmatpush2.msra.mxu0 0.0
          %2076 = vmatprep.mubr.f32.mxu0 0.0
          %2077 = vmatmul.mubr.f32.gmra.mxu0 %v2010
          %v2078 = vpop.f32.mrf.mxu0
          %v2079 = vadd.f32 %v2006, %v2078
          %v2080 = vpop.f32.mrf.mxu0
          %2081 = vdwg.mxu0
          %v2082 = vxor.u32 %v2079, 2147483648
          %v2083 = vmul.f32 %v2082, 1.442695
          %v2084 = vpow.pop %v2083
          %v2085 = vadd.f32 %v2084, 1.0
          %v2086 = vrcp.pop %v2085
          %v2087 = vmul.f32 1.0, %v2086
          %2088 = vst.msk [vmem:[%s203] sm:$0x1] %vm1004, %v2087
        $region44: #{tpu_custom_call.1} parent=31 // pred_fallthru
          _
        %s2089 = sand.u32 %s110, 1
        %s2090 = scalar_lea.sflag [#allocation6], %s2089
        %s2091 = sand.u32 %s110, 1
        %s2092 = scalar_lea.vmem [#allocation7], %s2091
        // Predicated region
        $region45: #{tpu_custom_call.1} parent=31 // pred_check
          %p2093 = pneg %p120
        $region46: #{tpu_custom_call.1} parent=31 // pred_check_branch
          %2095 = sbr.rel (%p2093) target = $region48
        $region47: #{tpu_custom_call.1} parent=31 // pred_region
          %s2097 = ssub.s32 16, 16
          %2098 = vsyncadd %s2090, %s2097
          %s2099 = smul.addr %s24, 16
          %s2100 = scalar_lea.hbm %s3, %s2099
          %s2102 = sshll.u32 %s2092, 4
          %s2103 = int_to_ptr.vmem [resolvable:$true] %s2102
          %2105 = dma.vmem_to_hbm [thread:$0]  %s2103, 16, %s2100, %s2090
        $region48: #{tpu_custom_call.1} parent=31 // pred_fallthru
          _
      $region32: #{tpu_custom_call.1} parent=5 // pred_fallthru
        _
      %p2106 = scmp.le.s32.totalorder 2, %s15
      // Predicated region
      $region49: #{tpu_custom_call.1} parent=5 // pred_check
        %p2107 = pneg %p2106
      $region50: #{tpu_custom_call.1} parent=5 // pred_check_branch
        %2109 = sbr.rel (%p2107) target = $region52
      $region51: #{tpu_custom_call.1} parent=5 // pred_region
        %s2110 = ssub.s32 %s15, 2
        // Predicated region
        $region53: #{tpu_custom_call.1} parent=51 // pred_check
          %p2111 = pneg %p126
        $region54: #{tpu_custom_call.1} parent=51 // pred_check_branch
          %2113 = sbr.rel (%p2111) target = $region56
        $region55: #{tpu_custom_call.1} parent=51 // pred_region
          %s2114 = sand.u32 %s111, 1
          %s2115 = scalar_lea.sflag [#allocation6], %s2114
          %s2116 = sand.u32 %s111, 1
          %s2117 = scalar_lea.vmem [#allocation7], %s2116
          %2118 = dma.done %s2115, 16
        $region56: #{tpu_custom_call.1} parent=51 // pred_fallthru
          _
      $region52: #{tpu_custom_call.1} parent=5 // pred_fallthru
        _
    $region6: #{tpu_custom_call.1} parent=1 // loop_footer
      %s19 = sadd.s32 1, %s15
    $region7: #{tpu_custom_call.1} parent=1 // loop_footer_branch
      %14 = sbr.rel target = $region3
    $region8: #{tpu_custom_call.1} parent=1 // loop_exit
      _
    %2119 = vsyncpa [#allocation5], 1
    %s2120 = scalar_lea.sflag [#allocation5], 1
    %2121 = vsyncpa %s2120, 1
    %2122 = vsyncpa [#allocation6], 1
    %s2123 = scalar_lea.sflag [#allocation6], 1
    %2124 = vsyncpa %s2123, 1

</llo_original>
